<compile_context>
chip_gen: v5e
topology: v5e:2x2
jax: 0.10.0
libtpu: 0.0.40
codegen_flags: <defaults>
</compile_context>

<pallas_src>
import functools
import math

import jax
import jax.numpy as jnp
from jax import lax
from jax.experimental import pallas as pl
from jax.experimental.pallas import tpu as pltpu

# f32 matmuls: required for the sandbox backend (no BF16 dot support).
_COMPUTE_DTYPE = jnp.float32


@functools.lru_cache(maxsize=None)
def _vmem_limit_bytes():
    """Generation-aware VMEM budget (~7/8 of capacity), safe fallback."""
    try:
        cap = int(pltpu.get_tpu_info().vmem_capacity_bytes)
    except Exception:  # no TPU attached (e.g. interpret mode on CPU)
        return 32 * 1024 * 1024
    return int(cap * 7) // 8


def _layernorm(x, w, b, eps=1e-5):
    mu = jnp.mean(x, axis=-1, keepdims=True)
    xc = x - mu
    var = jnp.mean(xc * xc, axis=-1, keepdims=True)
    return xc * lax.rsqrt(var + eps) * w + b


# --------------------------------------------------------------------------- #
# Fused per-layer kernel: one grid step == one batch element (whole block).
# The last layer additionally fuses the classifier head.
# --------------------------------------------------------------------------- #
def block_kernel(*refs, heads, scale, add_pos, fuse_head):
    idx = 0
    x_ref = refs[idx]; idx += 1
    pos_ref = None
    if add_pos:
        pos_ref = refs[idx]; idx += 1
    (wqkv_ref, wu_ref, bu_ref, ln1w_ref, ln1b_ref,
     w1_ref, b1_ref, w2_ref, b2_ref, ln2w_ref, ln2b_ref) = refs[idx:idx + 11]
    idx += 11
    if fuse_head:
        wout_ref, bout_ref = refs[idx:idx + 2]
        idx += 2
    o_ref = refs[idx]

    t, k = x_ref.shape
    s = k // heads

    x = x_ref[...]                                  # (t, k) f32
    if add_pos:                                     # embedding add folded in
        x = x + pos_ref[...]

    # ---- fused QKV projection with the Bloem transpose folded into the ----- #
    # ---- MXU operand orientation: (k,3k) x (t,k) -> (3k, t) directly. ------ #
    qkv_t = lax.dot_general(
        wqkv_ref[...], x.astype(_COMPUTE_DTYPE),
        dimension_numbers=(((0,), (1,)), ((), ())),
        preferred_element_type=jnp.float32)                  # (3k, t)

    # ---- Bloem scramble, entirely in VMEM ---------------------------------- #
    # PyTorch: q.transpose(1,2).contiguous().view(b*heads, t, s); per batch
    # element that is q.T (k, t) reinterpreted row-major as (heads, t, s).
    qkv_s = qkv_t.reshape(3, heads, t, s).astype(_COMPUTE_DTYPE)
    qs, ks, vs = qkv_s[0], qkv_s[1], qkv_s[2]                # (heads, t, s)

    # ---- scaled dot-product attention, all heads batched on the MXU -------- #
    dots = jnp.einsum("hts,hus->htu", qs, ks,
                      preferred_element_type=jnp.float32) * scale
    dots = dots - jnp.max(dots, axis=-1, keepdims=True)
    e = jnp.exp(dots)                                        # f32 softmax
    p = e / jnp.sum(e, axis=-1, keepdims=True)
    att = jnp.einsum("htu,hus->hts", p.astype(_COMPUTE_DTYPE), vs,
                     preferred_element_type=jnp.float32)     # (heads, t, s)

    # ---- unscramble + unify heads: one full-K matmul ------------------------ #
    # att_cat = att.transpose(1,0,2).reshape(t, k); uni = att_cat @ wu + bu.
    att_cat = jnp.transpose(att, (1, 0, 2)).reshape(t, k)
    uni = jnp.dot(att_cat.astype(_COMPUTE_DTYPE), wu_ref[...],
                  preferred_element_type=jnp.float32) + bu_ref[...]

    # ---- residual + LayerNorm 1 (f32) --------------------------------------- #
    h1 = _layernorm(uni + x, ln1w_ref[...], ln1b_ref[...])

    # ---- feed-forward k -> 4k -> k ------------------------------------------- #
    h1c = h1.astype(_COMPUTE_DTYPE)
    ff = jnp.dot(h1c, w1_ref[...],
                 preferred_element_type=jnp.float32) + b1_ref[...]
    ff = jnp.maximum(ff, 0.0)
    ff = jnp.dot(ff.astype(_COMPUTE_DTYPE), w2_ref[...],
                 preferred_element_type=jnp.float32) + b2_ref[...]

    # ---- residual + LayerNorm 2 (f32) ----------------------------------------- #
    h2 = _layernorm(ff + h1, ln2w_ref[...], ln2b_ref[...])

    if fuse_head:
        # mean over t -> toprobs linear -> log_softmax, all in VMEM.
        xm = jnp.mean(h2, axis=0, keepdims=True)                      # (1, k)
        logits = jnp.dot(xm.astype(_COMPUTE_DTYPE), wout_ref[...],
                         preferred_element_type=jnp.float32) + bout_ref[...]
        m = jnp.max(logits, axis=-1, keepdims=True)
        lse = m + jnp.log(jnp.sum(jnp.exp(logits - m), axis=-1, keepdims=True))
        o_ref[...] = logits - lse                                     # (1, ncls)
    else:
        o_ref[...] = h2


# --------------------------------------------------------------------------- #
# Wrappers
# --------------------------------------------------------------------------- #
def _full_spec(arr):
    nd = arr.ndim
    return pl.BlockSpec(arr.shape, lambda i, _nd=nd: (0,) * _nd)


def transformer_block(x, pos, blk, heads, head_weights=None):
    b, t, k = x.shape
    add_pos = pos is not None
    fuse_head = head_weights is not None

    args = [x]
    in_specs = [pl.BlockSpec((None, t, k), lambda i: (i, 0, 0))]
    if add_pos:
        args.append(pos)
        in_specs.append(pl.BlockSpec((t, k), lambda i: (0, 0)))

    weights = [blk["wqkv"], blk["wu"], blk["bu"],
               blk["ln1_w"], blk["ln1_b"],
               blk["w1"], blk["b1"], blk["w2"], blk["b2"],
               blk["ln2_w"], blk["ln2_b"]]
    if fuse_head:
        weights.extend(head_weights)          # [w_out (k,ncls), b_out (1,ncls)]
    args.extend(weights)
    # Constant index_maps -> weights stay VMEM-resident across grid steps.
    # TODO(synk): pipeline_mode=pl.Buffered(1) here to drop the unused double
    # buffer for these constant-index inputs.
    in_specs.extend(_full_spec(w) for w in weights)

    if fuse_head:
        ncls = head_weights[0].shape[1]
        out_shape = jax.ShapeDtypeStruct((b, 1, ncls), jnp.float32)
        out_spec = pl.BlockSpec((None, 1, ncls), lambda i: (i, 0, 0))
    else:
        out_shape = jax.ShapeDtypeStruct((b, t, k), jnp.float32)
        out_spec = pl.BlockSpec((None, t, k), lambda i: (i, 0, 0))

    kernel = functools.partial(block_kernel, heads=heads,
                               scale=1.0 / math.sqrt(k),
                               add_pos=add_pos, fuse_head=fuse_head)

    out = pl.pallas_call(
        kernel,
        out_shape=out_shape,
        grid=(b,),
        in_specs=in_specs,
        out_specs=out_spec,
        compiler_params=pltpu.CompilerParams(
            # TODO(synk): add a second "parallel" grid axis (t-tiles / heads)
            # so v7x megacore has work when b is small.
            dimension_semantics=("parallel",),
            vmem_limit_bytes=_vmem_limit_bytes()),
    )(*args)

    if fuse_head:
        return out.reshape(b, -1)             # (b, num_classes)
    return out


def prepare_params(params):
    """One-time derived-weight prep (hoisted out of the per-call wrapper)."""
    k = params["token_emb"].shape[1]
    ncls = params["w_out"].shape[1]
    cd = _COMPUTE_DTYPE
    blocks = []
    for blk in params["blocks"]:
        blocks.append({
            "wqkv": jnp.concatenate([blk["wq"], blk["wk"], blk["wv"]],
                                    axis=1).astype(cd),        # (k, 3k)
            "wu": blk["wu"].astype(cd),                        # (k, k)
            "bu": blk["bu"].reshape(1, k),
            "ln1_w": blk["ln1_w"].reshape(1, k),
            "ln1_b": blk["ln1_b"].reshape(1, k),
            "w1": blk["w1"].astype(cd),                        # (k, 4k)
            "b1": blk["b1"].reshape(1, 4 * k),
            "w2": blk["w2"].astype(cd),                        # (4k, k)
            "b2": blk["b2"].reshape(1, k),
            "ln2_w": blk["ln2_w"].reshape(1, k),
            "ln2_b": blk["ln2_b"].reshape(1, k),
        })
    return {
        "heads": params["heads"],
        "token_emb": params["token_emb"],
        "pos_emb": params["pos_emb"],
        "blocks": blocks,
        "w_out": params["w_out"].astype(cd),                   # (k, ncls)
        "b_out": params["b_out"].reshape(1, ncls),
    }


def transformer_forward(prepared, x_ids):
    # TODO(synk): the embedding-table gather (nn.Embedding) stays in plain JAX.
    tok = prepared["token_emb"][x_ids]                 # (b, t, k)
    b, t, k = tok.shape
    heads = prepared["heads"]
    pos = prepared["pos_emb"][:t]                      # (t, k)
    blocks = prepared["blocks"]
    assert len(blocks) >= 1
    head_w = [prepared["w_out"], prepared["b_out"]]

    x = tok
    last = len(blocks) - 1
    for li, blk in enumerate(blocks):
        x = transformer_block(
            x,
            pos if li == 0 else None,                  # pos add fused in blk 0
            blk, heads,
            head_weights=head_w if li == last else None)  # head fused in last
    return x                                            # (b, num_classes)


# --------------------------------------------------------------------------- #
# Params & pure-JAX f32 reference
# --------------------------------------------------------------------------- #
def init_params(key, k, heads, depth, seq_length, num_tokens, num_classes):
    keys = jax.random.split(key, 4 + depth)

    def nrm(kk, shape, scl=0.05):
        return scl * jax.random.normal(kk, shape, dtype=jnp.float32)

    params = {
        "heads": heads,
        "token_emb": nrm(keys[0], (num_tokens, k), 1.0),
        "pos_emb": nrm(keys[1], (seq_length, k), 1.0),
        "w_out": nrm(keys[2], (k, num_classes)),
        "b_out": nrm(keys[3], (num_classes,)),
        "blocks": [],
    }
    for d in range(depth):
        bk = jax.random.split(keys[4 + d], 8)
        params["blocks"].append({
            "wq": nrm(bk[0], (k, k)),
            "wk": nrm(bk[1], (k, k)),
            "wv": nrm(bk[2], (k, k)),
            "wu": nrm(bk[3], (k, k)),
            "bu": nrm(bk[4], (k,)),
            "ln1_w": jnp.ones((k,), jnp.float32),
            "ln1_b": jnp.zeros((k,), jnp.float32),
            "w1": nrm(bk[5], (k, 4 * k)),
            "b1": nrm(bk[6], (4 * k,)),
            "w2": nrm(bk[7], (4 * k, k)),
            "b2": jnp.zeros((k,), jnp.float32),
            "ln2_w": jnp.ones((k,), jnp.float32),
            "ln2_b": jnp.zeros((k,), jnp.float32),
        })
    return params


def reference_forward(params, x_ids):
    tok = params["token_emb"][x_ids]
    b, t, k = tok.shape
    heads = params["heads"]
    s = k // heads
    x = tok + params["pos_emb"][:t][None]
    for blk in params["blocks"]:
        q = x @ blk["wq"]
        kk = x @ blk["wk"]
        v = x @ blk["wv"]

        def scr(a):
            return jnp.transpose(a, (0, 2, 1)).reshape(b * heads, t, s)

        dot = jnp.einsum("bts,bus->btu", scr(q), scr(kk)) / math.sqrt(k)
        p = jax.nn.softmax(dot, axis=-1)
        o = jnp.einsum("btu,bus->bts", p, scr(v))
        att = jnp.transpose(o.reshape(b, heads, t, s),
                            (0, 2, 1, 3)).reshape(b, t, k)
        uni = att @ blk["wu"] + blk["bu"]
        h = _layernorm(uni + x, blk["ln1_w"], blk["ln1_b"])
        ff = jnp.maximum(h @ blk["w1"] + blk["b1"], 0.0) @ blk["w2"] + blk["b2"]
        x = _layernorm(ff + h, blk["ln2_w"], blk["ln2_b"])
    logits = jnp.mean(x, axis=1) @ params["w_out"] + params["b_out"]
    return jax.nn.log_softmax(logits, axis=1)


# --------------------------------------------------------------------------- #
# Main
# --------------------------------------------------------------------------- #
if __name__ == "__main__":
    K, HEADS, DEPTH, SEQ, NTOK, NCLS = 32, 4, 2, 8, 100, 4
    B = 2

    key = jax.random.PRNGKey(0)
    pkey, xkey = jax.random.split(key)
    params = init_params(pkey, K, HEADS, DEPTH, SEQ, NTOK, NCLS)
    prepared = prepare_params(params)
    x_ids = jax.random.randint(xkey, (B, SEQ), 0, NTOK, dtype=jnp.int32)

    out = transformer_forward(prepared, x_ids)
    out = jax.block_until_ready(out)

    ref = reference_forward(params, x_ids)
    assert out.shape == (B, NCLS), out.shape
    err = float(jnp.max(jnp.abs(out - ref)))
    assert err < 2e-2, f"max abs err vs f32 reference: {err}"

    print("KERNEL_OK")
</pallas_src>

<mosaic_0001>
module attributes {stable_mosaic.version = 11 : i64} {
  func.func @block_kernel(%arg0: i32, %arg1: memref<1x8x32xf32, #tpu.memory_space<vmem>>, %arg2: memref<8x32xf32, #tpu.memory_space<vmem>>, %arg3: memref<32x96xf32, #tpu.memory_space<vmem>>, %arg4: memref<32x32xf32, #tpu.memory_space<vmem>>, %arg5: memref<1x32xf32, #tpu.memory_space<vmem>>, %arg6: memref<1x32xf32, #tpu.memory_space<vmem>>, %arg7: memref<1x32xf32, #tpu.memory_space<vmem>>, %arg8: memref<32x128xf32, #tpu.memory_space<vmem>>, %arg9: memref<1x128xf32, #tpu.memory_space<vmem>>, %arg10: memref<128x32xf32, #tpu.memory_space<vmem>>, %arg11: memref<1x32xf32, #tpu.memory_space<vmem>>, %arg12: memref<1x32xf32, #tpu.memory_space<vmem>>, %arg13: memref<1x32xf32, #tpu.memory_space<vmem>>, %arg14: memref<1x8x32xf32, #tpu.memory_space<vmem>>) attributes {dimension_semantics = [#tpu.dimension_semantics<parallel>], iteration_bounds = array<i64: 2>, scalar_prefetch = 0 : i64, scratch_operands = 0 : i64, tpu.core_type = #tpu.core_type<tc>, window_params = [{transform_indices = @transform_0, window_bounds = array<i64: 1, 8, 32>}, {pipeline_mode = #tpu.pipeline_mode<synchronous>, transform_indices = @transform_1, window_bounds = array<i64: 8, 32>}, {pipeline_mode = #tpu.pipeline_mode<synchronous>, transform_indices = @transform_2, window_bounds = array<i64: 32, 96>}, {pipeline_mode = #tpu.pipeline_mode<synchronous>, transform_indices = @transform_3, window_bounds = array<i64: 32, 32>}, {pipeline_mode = #tpu.pipeline_mode<synchronous>, transform_indices = @transform_4, window_bounds = array<i64: 1, 32>}, {pipeline_mode = #tpu.pipeline_mode<synchronous>, transform_indices = @transform_5, window_bounds = array<i64: 1, 32>}, {pipeline_mode = #tpu.pipeline_mode<synchronous>, transform_indices = @transform_6, window_bounds = array<i64: 1, 32>}, {pipeline_mode = #tpu.pipeline_mode<synchronous>, transform_indices = @transform_7, window_bounds = array<i64: 32, 128>}, {pipeline_mode = #tpu.pipeline_mode<synchronous>, transform_indices = @transform_8, window_bounds = array<i64: 1, 128>}, {pipeline_mode = #tpu.pipeline_mode<synchronous>, transform_indices = @transform_9, window_bounds = array<i64: 128, 32>}, {pipeline_mode = #tpu.pipeline_mode<synchronous>, transform_indices = @transform_10, window_bounds = array<i64: 1, 32>}, {pipeline_mode = #tpu.pipeline_mode<synchronous>, transform_indices = @transform_11, window_bounds = array<i64: 1, 32>}, {pipeline_mode = #tpu.pipeline_mode<synchronous>, transform_indices = @transform_12, window_bounds = array<i64: 1, 32>}, {transform_indices = @transform_13, window_bounds = array<i64: 1, 8, 32>}]} {
    %c0 = arith.constant 0 : index
    %c0_0 = arith.constant 0 : index
    %c0_1 = arith.constant 0 : index
    %0 = vector.load %arg1[%c0, %c0_0, %c0_1] : memref<1x8x32xf32, #tpu.memory_space<vmem>>, vector<1x8x32xf32>
    %1 = vector.shape_cast %0 : vector<1x8x32xf32> to vector<8x32xf32>
    %c0_2 = arith.constant 0 : index
    %c0_3 = arith.constant 0 : index
    %2 = vector.load %arg2[%c0_2, %c0_3] : memref<8x32xf32, #tpu.memory_space<vmem>>, vector<8x32xf32>
    %3 = arith.addf %1, %2 : vector<8x32xf32>
    %c0_4 = arith.constant 0 : index
    %c0_5 = arith.constant 0 : index
    %4 = vector.load %arg3[%c0_4, %c0_5] : memref<32x96xf32, #tpu.memory_space<vmem>>, vector<32x96xf32>
    %cst = arith.constant dense<0.000000e+00> : vector<96x8xf32>
    %5 = tpu.matmul %4, %3, %cst {dimension_numbers = #tpu.dot_dimension_numbers<[0], [1], [1], [0], [0, 1, 1, 0], [], []>} : vector<32x96xf32>, vector<8x32xf32>, vector<96x8xf32> -> vector<96x8xf32>
    %6 = vector.shape_cast %5 : vector<96x8xf32> to vector<3x4x8x8xf32>
    %7 = vector.extract_strided_slice %6 {offsets = [0, 0, 0, 0], sizes = [1, 4, 8, 8], strides = [1, 1, 1, 1]} : vector<3x4x8x8xf32> to vector<1x4x8x8xf32>
    %8 = vector.shape_cast %7 : vector<1x4x8x8xf32> to vector<4x8x8xf32>
    %9 = vector.extract_strided_slice %6 {offsets = [1, 0, 0, 0], sizes = [1, 4, 8, 8], strides = [1, 1, 1, 1]} : vector<3x4x8x8xf32> to vector<1x4x8x8xf32>
    %10 = vector.shape_cast %9 : vector<1x4x8x8xf32> to vector<4x8x8xf32>
    %11 = vector.extract_strided_slice %6 {offsets = [2, 0, 0, 0], sizes = [1, 4, 8, 8], strides = [1, 1, 1, 1]} : vector<3x4x8x8xf32> to vector<1x4x8x8xf32>
    %12 = vector.shape_cast %11 : vector<1x4x8x8xf32> to vector<4x8x8xf32>
    "tpu.trace_start"() <{level = 10 : i32, message = "hts,hus->htu"}> : () -> ()
    %cst_6 = arith.constant dense<0.000000e+00> : vector<4x8x8xf32>
    %13 = tpu.matmul %8, %10, %cst_6 {dimension_numbers = #tpu.dot_dimension_numbers<[2], [2], [1], [1], [0, 0, 0, 1, 1, 1], [0], [0]>} : vector<4x8x8xf32>, vector<4x8x8xf32>, vector<4x8x8xf32> -> vector<4x8x8xf32>
    "tpu.trace_stop"() : () -> ()
    %cst_7 = arith.constant 0.176776692 : f32
    %14 = vector.broadcast %cst_7 : f32 to vector<4x8x8xf32>
    %15 = arith.mulf %13, %14 : vector<4x8x8xf32>
    %cst_8 = arith.constant dense<0xFF800000> : vector<4x8xf32>
    %16 = vector.multi_reduction <maximumf>, %15, %cst_8 [2] : vector<4x8x8xf32> to vector<4x8xf32>
    %17 = vector.shape_cast %16 : vector<4x8xf32> to vector<4x8x1xf32>
    %18 = vector.broadcast %17 : vector<4x8x1xf32> to vector<4x8x8xf32>
    %19 = arith.subf %15, %18 : vector<4x8x8xf32>
    %20 = math.exp %19 : vector<4x8x8xf32>
    %cst_9 = arith.constant dense<0.000000e+00> : vector<4x8xf32>
    %21 = vector.multi_reduction <add>, %20, %cst_9 [2] : vector<4x8x8xf32> to vector<4x8xf32>
    %22 = vector.shape_cast %21 : vector<4x8xf32> to vector<4x8x1xf32>
    %23 = vector.broadcast %22 : vector<4x8x1xf32> to vector<4x8x8xf32>
    %24 = arith.divf %20, %23 : vector<4x8x8xf32>
    "tpu.trace_start"() <{level = 10 : i32, message = "htu,hus->hts"}> : () -> ()
    %cst_10 = arith.constant dense<0.000000e+00> : vector<4x8x8xf32>
    %25 = tpu.matmul %24, %12, %cst_10 {dimension_numbers = #tpu.dot_dimension_numbers<[2], [1], [1], [2], [0, 0, 0, 1, 1, 2], [0], [0]>} : vector<4x8x8xf32>, vector<4x8x8xf32>, vector<4x8x8xf32> -> vector<4x8x8xf32>
    "tpu.trace_stop"() : () -> ()
    %26 = tpu.transpose %25, [1, 0, 2] : vector<4x8x8xf32> -> vector<8x4x8xf32>
    %27 = vector.shape_cast %26 : vector<8x4x8xf32> to vector<8x32xf32>
    %c0_11 = arith.constant 0 : index
    %c0_12 = arith.constant 0 : index
    %28 = vector.load %arg4[%c0_11, %c0_12] : memref<32x32xf32, #tpu.memory_space<vmem>>, vector<32x32xf32>
    %cst_13 = arith.constant dense<0.000000e+00> : vector<8x32xf32>
    %29 = tpu.matmul %27, %28, %cst_13 {dimension_numbers = #tpu.dot_dimension_numbers<[1], [0], [0], [1], [0, 0, 1, 1], [], []>} : vector<8x32xf32>, vector<32x32xf32>, vector<8x32xf32> -> vector<8x32xf32>
    %c0_14 = arith.constant 0 : index
    %c0_15 = arith.constant 0 : index
    %30 = vector.load %arg5[%c0_14, %c0_15] : memref<1x32xf32, #tpu.memory_space<vmem>>, vector<1x32xf32>
    %31 = vector.broadcast %30 : vector<1x32xf32> to vector<8x32xf32>
    %32 = arith.addf %29, %31 : vector<8x32xf32>
    %33 = arith.addf %32, %3 : vector<8x32xf32>
    %c0_16 = arith.constant 0 : index
    %c0_17 = arith.constant 0 : index
    %34 = vector.load %arg6[%c0_16, %c0_17] : memref<1x32xf32, #tpu.memory_space<vmem>>, vector<1x32xf32>
    %c0_18 = arith.constant 0 : index
    %c0_19 = arith.constant 0 : index
    %35 = vector.load %arg7[%c0_18, %c0_19] : memref<1x32xf32, #tpu.memory_space<vmem>>, vector<1x32xf32>
    %cst_20 = arith.constant dense<0.000000e+00> : vector<8xf32>
    %36 = vector.multi_reduction <add>, %33, %cst_20 [1] : vector<8x32xf32> to vector<8xf32>
    %37 = vector.shape_cast %36 : vector<8xf32> to vector<8x1xf32>
    %cst_21 = arith.constant 3.200000e+01 : f32
    %38 = vector.broadcast %cst_21 : f32 to vector<8x1xf32>
    %39 = arith.divf %37, %38 : vector<8x1xf32>
    %40 = vector.broadcast %39 : vector<8x1xf32> to vector<8x32xf32>
    %41 = arith.subf %33, %40 : vector<8x32xf32>
    %42 = arith.mulf %41, %41 : vector<8x32xf32>
    %cst_22 = arith.constant dense<0.000000e+00> : vector<8xf32>
    %43 = vector.multi_reduction <add>, %42, %cst_22 [1] : vector<8x32xf32> to vector<8xf32>
    %44 = vector.shape_cast %43 : vector<8xf32> to vector<8x1xf32>
    %cst_23 = arith.constant 3.200000e+01 : f32
    %45 = vector.broadcast %cst_23 : f32 to vector<8x1xf32>
    %46 = arith.divf %44, %45 : vector<8x1xf32>
    %cst_24 = arith.constant 9.99999974E-6 : f32
    %47 = vector.broadcast %cst_24 : f32 to vector<8x1xf32>
    %48 = arith.addf %46, %47 : vector<8x1xf32>
    %49 = math.rsqrt %48 : vector<8x1xf32>
    %50 = vector.broadcast %49 : vector<8x1xf32> to vector<8x32xf32>
    %51 = arith.mulf %41, %50 : vector<8x32xf32>
    %52 = vector.broadcast %34 : vector<1x32xf32> to vector<8x32xf32>
    %53 = arith.mulf %51, %52 : vector<8x32xf32>
    %54 = vector.broadcast %35 : vector<1x32xf32> to vector<8x32xf32>
    %55 = arith.addf %53, %54 : vector<8x32xf32>
    %c0_25 = arith.constant 0 : index
    %c0_26 = arith.constant 0 : index
    %56 = vector.load %arg8[%c0_25, %c0_26] : memref<32x128xf32, #tpu.memory_space<vmem>>, vector<32x128xf32>
    %cst_27 = arith.constant dense<0.000000e+00> : vector<8x128xf32>
    %57 = tpu.matmul %55, %56, %cst_27 {dimension_numbers = #tpu.dot_dimension_numbers<[1], [0], [0], [1], [0, 0, 1, 1], [], []>} : vector<8x32xf32>, vector<32x128xf32>, vector<8x128xf32> -> vector<8x128xf32>
    %c0_28 = arith.constant 0 : index
    %c0_29 = arith.constant 0 : index
    %58 = vector.load %arg9[%c0_28, %c0_29] : memref<1x128xf32, #tpu.memory_space<vmem>>, vector<1x128xf32>
    %59 = vector.broadcast %58 : vector<1x128xf32> to vector<8x128xf32>
    %60 = arith.addf %57, %59 : vector<8x128xf32>
    %cst_30 = arith.constant 0.000000e+00 : f32
    %61 = vector.broadcast %cst_30 : f32 to vector<8x128xf32>
    %62 = arith.maximumf %60, %61 : vector<8x128xf32>
    %c0_31 = arith.constant 0 : index
    %c0_32 = arith.constant 0 : index
    %63 = vector.load %arg10[%c0_31, %c0_32] : memref<128x32xf32, #tpu.memory_space<vmem>>, vector<128x32xf32>
    %cst_33 = arith.constant dense<0.000000e+00> : vector<8x32xf32>
    %64 = tpu.matmul %62, %63, %cst_33 {dimension_numbers = #tpu.dot_dimension_numbers<[1], [0], [0], [1], [0, 0, 1, 1], [], []>} : vector<8x128xf32>, vector<128x32xf32>, vector<8x32xf32> -> vector<8x32xf32>
    %c0_34 = arith.constant 0 : index
    %c0_35 = arith.constant 0 : index
    %65 = vector.load %arg11[%c0_34, %c0_35] : memref<1x32xf32, #tpu.memory_space<vmem>>, vector<1x32xf32>
    %66 = vector.broadcast %65 : vector<1x32xf32> to vector<8x32xf32>
    %67 = arith.addf %64, %66 : vector<8x32xf32>
    %68 = arith.addf %67, %55 : vector<8x32xf32>
    %c0_36 = arith.constant 0 : index
    %c0_37 = arith.constant 0 : index
    %69 = vector.load %arg12[%c0_36, %c0_37] : memref<1x32xf32, #tpu.memory_space<vmem>>, vector<1x32xf32>
    %c0_38 = arith.constant 0 : index
    %c0_39 = arith.constant 0 : index
    %70 = vector.load %arg13[%c0_38, %c0_39] : memref<1x32xf32, #tpu.memory_space<vmem>>, vector<1x32xf32>
    %cst_40 = arith.constant dense<0.000000e+00> : vector<8xf32>
    %71 = vector.multi_reduction <add>, %68, %cst_40 [1] : vector<8x32xf32> to vector<8xf32>
    %72 = vector.shape_cast %71 : vector<8xf32> to vector<8x1xf32>
    %cst_41 = arith.constant 3.200000e+01 : f32
    %73 = vector.broadcast %cst_41 : f32 to vector<8x1xf32>
    %74 = arith.divf %72, %73 : vector<8x1xf32>
    %75 = vector.broadcast %74 : vector<8x1xf32> to vector<8x32xf32>
    %76 = arith.subf %68, %75 : vector<8x32xf32>
    %77 = arith.mulf %76, %76 : vector<8x32xf32>
    %cst_42 = arith.constant dense<0.000000e+00> : vector<8xf32>
    %78 = vector.multi_reduction <add>, %77, %cst_42 [1] : vector<8x32xf32> to vector<8xf32>
    %79 = vector.shape_cast %78 : vector<8xf32> to vector<8x1xf32>
    %cst_43 = arith.constant 3.200000e+01 : f32
    %80 = vector.broadcast %cst_43 : f32 to vector<8x1xf32>
    %81 = arith.divf %79, %80 : vector<8x1xf32>
    %cst_44 = arith.constant 9.99999974E-6 : f32
    %82 = vector.broadcast %cst_44 : f32 to vector<8x1xf32>
    %83 = arith.addf %81, %82 : vector<8x1xf32>
    %84 = math.rsqrt %83 : vector<8x1xf32>
    %85 = vector.broadcast %84 : vector<8x1xf32> to vector<8x32xf32>
    %86 = arith.mulf %76, %85 : vector<8x32xf32>
    %87 = vector.broadcast %69 : vector<1x32xf32> to vector<8x32xf32>
    %88 = arith.mulf %86, %87 : vector<8x32xf32>
    %89 = vector.broadcast %70 : vector<1x32xf32> to vector<8x32xf32>
    %90 = arith.addf %88, %89 : vector<8x32xf32>
    %c0_45 = arith.constant 0 : index
    %c0_46 = arith.constant 0 : index
    %c0_47 = arith.constant 0 : index
    %91 = vector.load %arg14[%c0_45, %c0_46, %c0_47] : memref<1x8x32xf32, #tpu.memory_space<vmem>>, vector<1x8x32xf32>
    %92 = vector.shape_cast %91 : vector<1x8x32xf32> to vector<8x32xf32>
    %93 = vector.shape_cast %90 : vector<8x32xf32> to vector<1x8x32xf32>
    tpu.vector_store %arg14[%c0_45, %c0_46, %c0_47], %93 {strides = array<i32>} : memref<1x8x32xf32, #tpu.memory_space<vmem>>, vector<1x8x32xf32>,
    return
  }
  func.func @transform_0(%arg0: i32) -> (i32, i32, i32) {
    %c0_i32 = arith.constant 0 : i32
    %c0_i32_0 = arith.constant 0 : i32
    %c0_i32_1 = arith.constant 0 : i32
    return %arg0, %c0_i32, %c0_i32_0 : i32, i32, i32
  }
  func.func @transform_1(%arg0: i32) -> (i32, i32) {
    %c0_i32 = arith.constant 0 : i32
    %c0_i32_0 = arith.constant 0 : i32
    %c0_i32_1 = arith.constant 0 : i32
    return %c0_i32, %c0_i32_0 : i32, i32
  }
  func.func @transform_2(%arg0: i32) -> (i32, i32) {
    %c0_i32 = arith.constant 0 : i32
    %c0_i32_0 = arith.constant 0 : i32
    %c0_i32_1 = arith.constant 0 : i32
    return %c0_i32, %c0_i32_0 : i32, i32
  }
  func.func @transform_3(%arg0: i32) -> (i32, i32) {
    %c0_i32 = arith.constant 0 : i32
    %c0_i32_0 = arith.constant 0 : i32
    %c0_i32_1 = arith.constant 0 : i32
    return %c0_i32, %c0_i32_0 : i32, i32
  }
  func.func @transform_4(%arg0: i32) -> (i32, i32) {
    %c0_i32 = arith.constant 0 : i32
    %c0_i32_0 = arith.constant 0 : i32
    %c0_i32_1 = arith.constant 0 : i32
    return %c0_i32, %c0_i32_0 : i32, i32
  }
  func.func @transform_5(%arg0: i32) -> (i32, i32) {
    %c0_i32 = arith.constant 0 : i32
    %c0_i32_0 = arith.constant 0 : i32
    %c0_i32_1 = arith.constant 0 : i32
    return %c0_i32, %c0_i32_0 : i32, i32
  }
  func.func @transform_6(%arg0: i32) -> (i32, i32) {
    %c0_i32 = arith.constant 0 : i32
    %c0_i32_0 = arith.constant 0 : i32
    %c0_i32_1 = arith.constant 0 : i32
    return %c0_i32, %c0_i32_0 : i32, i32
  }
  func.func @transform_7(%arg0: i32) -> (i32, i32) {
    %c0_i32 = arith.constant 0 : i32
    %c0_i32_0 = arith.constant 0 : i32
    %c0_i32_1 = arith.constant 0 : i32
    return %c0_i32, %c0_i32_0 : i32, i32
  }
  func.func @transform_8(%arg0: i32) -> (i32, i32) {
    %c0_i32 = arith.constant 0 : i32
    %c0_i32_0 = arith.constant 0 : i32
    %c0_i32_1 = arith.constant 0 : i32
    return %c0_i32, %c0_i32_0 : i32, i32
  }
  func.func @transform_9(%arg0: i32) -> (i32, i32) {
    %c0_i32 = arith.constant 0 : i32
    %c0_i32_0 = arith.constant 0 : i32
    %c0_i32_1 = arith.constant 0 : i32
    return %c0_i32, %c0_i32_0 : i32, i32
  }
  func.func @transform_10(%arg0: i32) -> (i32, i32) {
    %c0_i32 = arith.constant 0 : i32
    %c0_i32_0 = arith.constant 0 : i32
    %c0_i32_1 = arith.constant 0 : i32
    return %c0_i32, %c0_i32_0 : i32, i32
  }
  func.func @transform_11(%arg0: i32) -> (i32, i32) {
    %c0_i32 = arith.constant 0 : i32
    %c0_i32_0 = arith.constant 0 : i32
    %c0_i32_1 = arith.constant 0 : i32
    return %c0_i32, %c0_i32_0 : i32, i32
  }
  func.func @transform_12(%arg0: i32) -> (i32, i32) {
    %c0_i32 = arith.constant 0 : i32
    %c0_i32_0 = arith.constant 0 : i32
    %c0_i32_1 = arith.constant 0 : i32
    return %c0_i32, %c0_i32_0 : i32, i32
  }
  func.func @transform_13(%arg0: i32) -> (i32, i32, i32) {
    %c0_i32 = arith.constant 0 : i32
    %c0_i32_0 = arith.constant 0 : i32
    %c0_i32_1 = arith.constant 0 : i32
    return %arg0, %c0_i32, %c0_i32_0 : i32, i32, i32
  }
}

</mosaic_0001>

<llo_original>
// kernel: tpu_custom_call.1
$region0: #{tpu_custom_call.1}
  #allocation0 [shape = 'u32[]', space=smem, size = 0x4, offset = 0x4, fixed_abs, tag = 'smem constant byte address 0x4 - core index']
  #allocation1 [shape = 'u32[72,128]{1,0:T(1,128)}', space=vmem, size = 0x9000, scoped, tag = 'internal scratch']
  %s0 = inlined_call_operand.vmem [shape: f32[2,8,32], index: 0, kind: input, shape index: {}]
  %s1 = inlined_call_operand.vmem [shape: f32[8,32], index: 1, kind: input, shape index: {}]
  %s2 = inlined_call_operand.vmem [shape: f32[32,96], index: 2, kind: input, shape index: {}]
  %s3 = inlined_call_operand.vmem [shape: f32[32,32], index: 3, kind: input, shape index: {}]
  %s4 = inlined_call_operand.vmem [shape: f32[1,32], index: 4, kind: input, shape index: {}]
  %s5 = inlined_call_operand.vmem [shape: f32[1,32], index: 5, kind: input, shape index: {}]
  %s6 = inlined_call_operand.vmem [shape: f32[1,32], index: 6, kind: input, shape index: {}]
  %s7 = inlined_call_operand.vmem [shape: f32[32,128], index: 7, kind: input, shape index: {}]
  %s8 = inlined_call_operand.vmem [shape: f32[1,128], index: 8, kind: input, shape index: {}]
  %s9 = inlined_call_operand.vmem [shape: f32[128,32], index: 9, kind: input, shape index: {}]
  %s10 = inlined_call_operand.vmem [shape: f32[1,32], index: 10, kind: input, shape index: {}]
  %s11 = inlined_call_operand.vmem [shape: f32[1,32], index: 11, kind: input, shape index: {}]
  %s12 = inlined_call_operand.vmem [shape: f32[1,32], index: 12, kind: input, shape index: {}]
  %s13 = inlined_call_operand.hbm [shape: f32[2,8,32], index: 13, kind: output, shape index: {}]
  %s14 = sld [smem:[#allocation0]]
  $region85: #{tpu_custom_call.1} parent=0
    _
  %s16 = ssub.s32 1, %s14
  %s17 = scalar_select 0, %s16, %s14
  $region1: #{tpu_custom_call.1} parent=0
    #allocation2 [shape = 'u8[8192]{0}', space=vmem, size = 0x2000, scoped, tag = 'output window, operand 0']
    #allocation3 [shape = 's32[2]{0}', space=sflag, size = 0x8, scoped, tag = 'scoped memory for tpu_custom_call.1']
    %18 = vsyncpa [#allocation3], 0
    %s19 = scalar_lea.sflag [#allocation3], 1
    %20 = vsyncpa %s19, 0
    loop: start=0, step=1, limit=4
    $region2: #{tpu_custom_call.1} parent=1 // loop_pre_header
      _
    $region3: #{tpu_custom_call.1} parent=1 // loop_header
      %s22 = sphi 0, %s26
      %p23 = scmp.ge.s32.totalorder %s22, 4
      %s32 = sphi 0, %s34
      %s35 = sphi 0, %s32
      %s36 = sphi 0, %s35
      %s52 = sphi 0, %s36
      %s56 = sphi 0, %s56
      %s58 = sphi 0, %s56
      %s59 = sphi 0, %s58
      %s73 = sphi 0, %s59
      %s77 = sphi 0, %s77
      %s79 = sphi 0, %s77
      %s80 = sphi 0, %s79
      %s94 = sphi 0, %s80
      %s98 = sphi 0, %s98
      %s100 = sphi 0, %s98
      %s101 = sphi 0, %s100
      %s115 = sphi 0, %s101
      %s119 = sphi 0, %s119
      %s121 = sphi 0, %s119
      %s122 = sphi 0, %s121
      %s136 = sphi 0, %s122
      %s140 = sphi 0, %s140
      %s142 = sphi 0, %s140
      %s143 = sphi 0, %s142
      %s157 = sphi 0, %s143
      %s161 = sphi 0, %s161
      %s163 = sphi 0, %s161
      %s164 = sphi 0, %s163
      %s178 = sphi 0, %s164
      %s182 = sphi 0, %s182
      %s184 = sphi 0, %s182
      %s185 = sphi 0, %s184
      %s199 = sphi 0, %s185
      %s203 = sphi 0, %s203
      %s205 = sphi 0, %s203
      %s206 = sphi 0, %s205
      %s220 = sphi 0, %s206
      %s224 = sphi 0, %s224
      %s226 = sphi 0, %s224
      %s227 = sphi 0, %s226
      %s241 = sphi 0, %s227
      %s245 = sphi 0, %s245
      %s247 = sphi 0, %s245
      %s248 = sphi 0, %s247
      %s262 = sphi 0, %s248
      %s266 = sphi 0, %s266
      %s268 = sphi 0, %s266
      %s269 = sphi 0, %s268
      %s283 = sphi 0, %s269
      %s287 = sphi 0, %s287
      %s289 = sphi 0, %s287
      %s290 = sphi 0, %s289
      %s304 = sphi 0, %s290
      %s310 = sphi 0, %s312
      %s313 = sphi 0, %s310
      %s314 = sphi 0, %s313
      %s330 = sphi 0, %s314
    $region4: #{tpu_custom_call.1} parent=1 // loop_header_branch
      %25 = sbr.rel (%p23) target = $region8
    $region5: #{tpu_custom_call.1} parent=1 // loop_body
      %s27 = ssub.s32 %s22, 1
      %s28 = ssub.s32 %s22, 2
      %s29 = sadd.s32 %s22, 1
      %s30 = ssub.s32 %s22, %s29
      %p31 = scmp.eq.s32.totalorder %s30, 0
      %s33 = sadd.s32 %s32, 1
      %s34 = scalar_select %p31, %s32, %s33
      %p37 = pneg %p31
      %p38 = scmp.eq.s32.totalorder %s22, 1
      %p39 = por %p37, %p38
      %p40 = scmp.ne.s32.totalorder %s32, %s35
      %p41 = scmp.eq.s32.totalorder %s22, 0
      %p42 = por %p40, %p41
      %p43 = scmp.ne.s32.totalorder %s32, %s35
      %p44 = scmp.eq.s32.totalorder %s27, 1
      %p45 = por %p43, %p44
      %p46 = scmp.ne.s32.totalorder %s35, %s36
      %p47 = scmp.eq.s32.totalorder %s27, 0
      %p48 = por %p46, %p47
      %p49 = scmp.ne.s32.totalorder %s35, %s36
      %p50 = scmp.eq.s32.totalorder %s28, 1
      %p51 = por %p49, %p50
      %p53 = scmp.ne.s32.totalorder %s36, %s52
      %p54 = scmp.eq.s32.totalorder %s28, 0
      %p55 = por %p53, %p54
      %s57 = sadd.s32 %s56, 1
      %p60 = scmp.eq.s32.totalorder %s22, 1
      %p61 = scmp.ne.s32.totalorder %s56, %s58
      %p62 = scmp.eq.s32.totalorder %s22, 0
      %p63 = por %p61, %p62
      %p64 = scmp.ne.s32.totalorder %s56, %s58
      %p65 = scmp.eq.s32.totalorder %s27, 1
      %p66 = por %p64, %p65
      %p67 = scmp.ne.s32.totalorder %s58, %s59
      %p68 = scmp.eq.s32.totalorder %s27, 0
      %p69 = por %p67, %p68
      %p70 = scmp.ne.s32.totalorder %s58, %s59
      %p71 = scmp.eq.s32.totalorder %s28, 1
      %p72 = por %p70, %p71
      %p74 = scmp.ne.s32.totalorder %s59, %s73
      %p75 = scmp.eq.s32.totalorder %s28, 0
      %p76 = por %p74, %p75
      %s78 = sadd.s32 %s77, 1
      %p81 = scmp.eq.s32.totalorder %s22, 1
      %p82 = scmp.ne.s32.totalorder %s77, %s79
      %p83 = scmp.eq.s32.totalorder %s22, 0
      %p84 = por %p82, %p83
      %p85 = scmp.ne.s32.totalorder %s77, %s79
      %p86 = scmp.eq.s32.totalorder %s27, 1
      %p87 = por %p85, %p86
      %p88 = scmp.ne.s32.totalorder %s79, %s80
      %p89 = scmp.eq.s32.totalorder %s27, 0
      %p90 = por %p88, %p89
      %p91 = scmp.ne.s32.totalorder %s79, %s80
      %p92 = scmp.eq.s32.totalorder %s28, 1
      %p93 = por %p91, %p92
      %p95 = scmp.ne.s32.totalorder %s80, %s94
      %p96 = scmp.eq.s32.totalorder %s28, 0
      %p97 = por %p95, %p96
      %s99 = sadd.s32 %s98, 1
      %p102 = scmp.eq.s32.totalorder %s22, 1
      %p103 = scmp.ne.s32.totalorder %s98, %s100
      %p104 = scmp.eq.s32.totalorder %s22, 0
      %p105 = por %p103, %p104
      %p106 = scmp.ne.s32.totalorder %s98, %s100
      %p107 = scmp.eq.s32.totalorder %s27, 1
      %p108 = por %p106, %p107
      %p109 = scmp.ne.s32.totalorder %s100, %s101
      %p110 = scmp.eq.s32.totalorder %s27, 0
      %p111 = por %p109, %p110
      %p112 = scmp.ne.s32.totalorder %s100, %s101
      %p113 = scmp.eq.s32.totalorder %s28, 1
      %p114 = por %p112, %p113
      %p116 = scmp.ne.s32.totalorder %s101, %s115
      %p117 = scmp.eq.s32.totalorder %s28, 0
      %p118 = por %p116, %p117
      %s120 = sadd.s32 %s119, 1
      %p123 = scmp.eq.s32.totalorder %s22, 1
      %p124 = scmp.ne.s32.totalorder %s119, %s121
      %p125 = scmp.eq.s32.totalorder %s22, 0
      %p126 = por %p124, %p125
      %p127 = scmp.ne.s32.totalorder %s119, %s121
      %p128 = scmp.eq.s32.totalorder %s27, 1
      %p129 = por %p127, %p128
      %p130 = scmp.ne.s32.totalorder %s121, %s122
      %p131 = scmp.eq.s32.totalorder %s27, 0
      %p132 = por %p130, %p131
      %p133 = scmp.ne.s32.totalorder %s121, %s122
      %p134 = scmp.eq.s32.totalorder %s28, 1
      %p135 = por %p133, %p134
      %p137 = scmp.ne.s32.totalorder %s122, %s136
      %p138 = scmp.eq.s32.totalorder %s28, 0
      %p139 = por %p137, %p138
      %s141 = sadd.s32 %s140, 1
      %p144 = scmp.eq.s32.totalorder %s22, 1
      %p145 = scmp.ne.s32.totalorder %s140, %s142
      %p146 = scmp.eq.s32.totalorder %s22, 0
      %p147 = por %p145, %p146
      %p148 = scmp.ne.s32.totalorder %s140, %s142
      %p149 = scmp.eq.s32.totalorder %s27, 1
      %p150 = por %p148, %p149
      %p151 = scmp.ne.s32.totalorder %s142, %s143
      %p152 = scmp.eq.s32.totalorder %s27, 0
      %p153 = por %p151, %p152
      %p154 = scmp.ne.s32.totalorder %s142, %s143
      %p155 = scmp.eq.s32.totalorder %s28, 1
      %p156 = por %p154, %p155
      %p158 = scmp.ne.s32.totalorder %s143, %s157
      %p159 = scmp.eq.s32.totalorder %s28, 0
      %p160 = por %p158, %p159
      %s162 = sadd.s32 %s161, 1
      %p165 = scmp.eq.s32.totalorder %s22, 1
      %p166 = scmp.ne.s32.totalorder %s161, %s163
      %p167 = scmp.eq.s32.totalorder %s22, 0
      %p168 = por %p166, %p167
      %p169 = scmp.ne.s32.totalorder %s161, %s163
      %p170 = scmp.eq.s32.totalorder %s27, 1
      %p171 = por %p169, %p170
      %p172 = scmp.ne.s32.totalorder %s163, %s164
      %p173 = scmp.eq.s32.totalorder %s27, 0
      %p174 = por %p172, %p173
      %p175 = scmp.ne.s32.totalorder %s163, %s164
      %p176 = scmp.eq.s32.totalorder %s28, 1
      %p177 = por %p175, %p176
      %p179 = scmp.ne.s32.totalorder %s164, %s178
      %p180 = scmp.eq.s32.totalorder %s28, 0
      %p181 = por %p179, %p180
      %s183 = sadd.s32 %s182, 1
      %p186 = scmp.eq.s32.totalorder %s22, 1
      %p187 = scmp.ne.s32.totalorder %s182, %s184
      %p188 = scmp.eq.s32.totalorder %s22, 0
      %p189 = por %p187, %p188
      %p190 = scmp.ne.s32.totalorder %s182, %s184
      %p191 = scmp.eq.s32.totalorder %s27, 1
      %p192 = por %p190, %p191
      %p193 = scmp.ne.s32.totalorder %s184, %s185
      %p194 = scmp.eq.s32.totalorder %s27, 0
      %p195 = por %p193, %p194
      %p196 = scmp.ne.s32.totalorder %s184, %s185
      %p197 = scmp.eq.s32.totalorder %s28, 1
      %p198 = por %p196, %p197
      %p200 = scmp.ne.s32.totalorder %s185, %s199
      %p201 = scmp.eq.s32.totalorder %s28, 0
      %p202 = por %p200, %p201
      %s204 = sadd.s32 %s203, 1
      %p207 = scmp.eq.s32.totalorder %s22, 1
      %p208 = scmp.ne.s32.totalorder %s203, %s205
      %p209 = scmp.eq.s32.totalorder %s22, 0
      %p210 = por %p208, %p209
      %p211 = scmp.ne.s32.totalorder %s203, %s205
      %p212 = scmp.eq.s32.totalorder %s27, 1
      %p213 = por %p211, %p212
      %p214 = scmp.ne.s32.totalorder %s205, %s206
      %p215 = scmp.eq.s32.totalorder %s27, 0
      %p216 = por %p214, %p215
      %p217 = scmp.ne.s32.totalorder %s205, %s206
      %p218 = scmp.eq.s32.totalorder %s28, 1
      %p219 = por %p217, %p218
      %p221 = scmp.ne.s32.totalorder %s206, %s220
      %p222 = scmp.eq.s32.totalorder %s28, 0
      %p223 = por %p221, %p222
      %s225 = sadd.s32 %s224, 1
      %p228 = scmp.eq.s32.totalorder %s22, 1
      %p229 = scmp.ne.s32.totalorder %s224, %s226
      %p230 = scmp.eq.s32.totalorder %s22, 0
      %p231 = por %p229, %p230
      %p232 = scmp.ne.s32.totalorder %s224, %s226
      %p233 = scmp.eq.s32.totalorder %s27, 1
      %p234 = por %p232, %p233
      %p235 = scmp.ne.s32.totalorder %s226, %s227
      %p236 = scmp.eq.s32.totalorder %s27, 0
      %p237 = por %p235, %p236
      %p238 = scmp.ne.s32.totalorder %s226, %s227
      %p239 = scmp.eq.s32.totalorder %s28, 1
      %p240 = por %p238, %p239
      %p242 = scmp.ne.s32.totalorder %s227, %s241
      %p243 = scmp.eq.s32.totalorder %s28, 0
      %p244 = por %p242, %p243
      %s246 = sadd.s32 %s245, 1
      %p249 = scmp.eq.s32.totalorder %s22, 1
      %p250 = scmp.ne.s32.totalorder %s245, %s247
      %p251 = scmp.eq.s32.totalorder %s22, 0
      %p252 = por %p250, %p251
      %p253 = scmp.ne.s32.totalorder %s245, %s247
      %p254 = scmp.eq.s32.totalorder %s27, 1
      %p255 = por %p253, %p254
      %p256 = scmp.ne.s32.totalorder %s247, %s248
      %p257 = scmp.eq.s32.totalorder %s27, 0
      %p258 = por %p256, %p257
      %p259 = scmp.ne.s32.totalorder %s247, %s248
      %p260 = scmp.eq.s32.totalorder %s28, 1
      %p261 = por %p259, %p260
      %p263 = scmp.ne.s32.totalorder %s248, %s262
      %p264 = scmp.eq.s32.totalorder %s28, 0
      %p265 = por %p263, %p264
      %s267 = sadd.s32 %s266, 1
      %p270 = scmp.eq.s32.totalorder %s22, 1
      %p271 = scmp.ne.s32.totalorder %s266, %s268
      %p272 = scmp.eq.s32.totalorder %s22, 0
      %p273 = por %p271, %p272
      %p274 = scmp.ne.s32.totalorder %s266, %s268
      %p275 = scmp.eq.s32.totalorder %s27, 1
      %p276 = por %p274, %p275
      %p277 = scmp.ne.s32.totalorder %s268, %s269
      %p278 = scmp.eq.s32.totalorder %s27, 0
      %p279 = por %p277, %p278
      %p280 = scmp.ne.s32.totalorder %s268, %s269
      %p281 = scmp.eq.s32.totalorder %s28, 1
      %p282 = por %p280, %p281
      %p284 = scmp.ne.s32.totalorder %s269, %s283
      %p285 = scmp.eq.s32.totalorder %s28, 0
      %p286 = por %p284, %p285
      %s288 = sadd.s32 %s287, 1
      %p291 = scmp.eq.s32.totalorder %s22, 1
      %p292 = scmp.ne.s32.totalorder %s287, %s289
      %p293 = scmp.eq.s32.totalorder %s22, 0
      %p294 = por %p292, %p293
      %p295 = scmp.ne.s32.totalorder %s287, %s289
      %p296 = scmp.eq.s32.totalorder %s27, 1
      %p297 = por %p295, %p296
      %p298 = scmp.ne.s32.totalorder %s289, %s290
      %p299 = scmp.eq.s32.totalorder %s27, 0
      %p300 = por %p298, %p299
      %p301 = scmp.ne.s32.totalorder %s289, %s290
      %p302 = scmp.eq.s32.totalorder %s28, 1
      %p303 = por %p301, %p302
      %p305 = scmp.ne.s32.totalorder %s290, %s304
      %p306 = scmp.eq.s32.totalorder %s28, 0
      %p307 = por %p305, %p306
      %s308 = ssub.s32 %s22, %s29
      %p309 = scmp.eq.s32.totalorder %s308, 0
      %s311 = sadd.s32 %s310, 1
      %s312 = scalar_select %p309, %s310, %s311
      %p315 = pneg %p309
      %p316 = scmp.eq.s32.totalorder %s22, 1
      %p317 = por %p315, %p316
      %p318 = scmp.ne.s32.totalorder %s310, %s313
      %p319 = scmp.eq.s32.totalorder %s22, 0
      %p320 = por %p318, %p319
      %p321 = scmp.ne.s32.totalorder %s310, %s313
      %p322 = scmp.eq.s32.totalorder %s27, 1
      %p323 = por %p321, %p322
      %p324 = scmp.ne.s32.totalorder %s313, %s314
      %p325 = scmp.eq.s32.totalorder %s27, 0
      %p326 = por %p324, %p325
      %p327 = scmp.ne.s32.totalorder %s313, %s314
      %p328 = scmp.eq.s32.totalorder %s28, 1
      %p329 = por %p327, %p328
      %p331 = scmp.ne.s32.totalorder %s314, %s330
      %p332 = scmp.eq.s32.totalorder %s28, 0
      %p333 = por %p331, %p332
      %p334 = scmp.le.s32.totalorder 1, %s22
      %p335 = scmp.lt.s32.totalorder %s22, 3
      %p336 = pnand %p334, %p335
      %p337 = pneg %p336
      // Predicated region
      $region9: #{tpu_custom_call.1} parent=5 // pred_check
        _
      $region10: #{tpu_custom_call.1} parent=5 // pred_check_branch
        %339 = sbr.rel (%p336) target = $region12
      $region11: #{tpu_custom_call.1} parent=5 // pred_region
        %s340 = ssub.s32 %s22, 1
        // Predicated region
        $region13: #{tpu_custom_call.1} parent=11 // pred_check
          %p341 = pneg %p69
        $region14: #{tpu_custom_call.1} parent=11 // pred_check_branch
          %343 = sbr.rel (%p341) target = $region16
        $region15: #{tpu_custom_call.1} parent=11 // pred_region
          _
        $region16: #{tpu_custom_call.1} parent=11 // pred_fallthru
          _
        // Predicated region
        $region17: #{tpu_custom_call.1} parent=11 // pred_check
          %p344 = pneg %p90
        $region18: #{tpu_custom_call.1} parent=11 // pred_check_branch
          %346 = sbr.rel (%p344) target = $region20
        $region19: #{tpu_custom_call.1} parent=11 // pred_region
          _
        $region20: #{tpu_custom_call.1} parent=11 // pred_fallthru
          _
        // Predicated region
        $region21: #{tpu_custom_call.1} parent=11 // pred_check
          %p347 = pneg %p111
        $region22: #{tpu_custom_call.1} parent=11 // pred_check_branch
          %349 = sbr.rel (%p347) target = $region24
        $region23: #{tpu_custom_call.1} parent=11 // pred_region
          _
        $region24: #{tpu_custom_call.1} parent=11 // pred_fallthru
          _
        // Predicated region
        $region25: #{tpu_custom_call.1} parent=11 // pred_check
          %p350 = pneg %p132
        $region26: #{tpu_custom_call.1} parent=11 // pred_check_branch
          %352 = sbr.rel (%p350) target = $region28
        $region27: #{tpu_custom_call.1} parent=11 // pred_region
          _
        $region28: #{tpu_custom_call.1} parent=11 // pred_fallthru
          _
        // Predicated region
        $region29: #{tpu_custom_call.1} parent=11 // pred_check
          %p353 = pneg %p153
        $region30: #{tpu_custom_call.1} parent=11 // pred_check_branch
          %355 = sbr.rel (%p353) target = $region32
        $region31: #{tpu_custom_call.1} parent=11 // pred_region
          _
        $region32: #{tpu_custom_call.1} parent=11 // pred_fallthru
          _
        // Predicated region
        $region33: #{tpu_custom_call.1} parent=11 // pred_check
          %p356 = pneg %p174
        $region34: #{tpu_custom_call.1} parent=11 // pred_check_branch
          %358 = sbr.rel (%p356) target = $region36
        $region35: #{tpu_custom_call.1} parent=11 // pred_region
          _
        $region36: #{tpu_custom_call.1} parent=11 // pred_fallthru
          _
        // Predicated region
        $region37: #{tpu_custom_call.1} parent=11 // pred_check
          %p359 = pneg %p195
        $region38: #{tpu_custom_call.1} parent=11 // pred_check_branch
          %361 = sbr.rel (%p359) target = $region40
        $region39: #{tpu_custom_call.1} parent=11 // pred_region
          _
        $region40: #{tpu_custom_call.1} parent=11 // pred_fallthru
          _
        // Predicated region
        $region41: #{tpu_custom_call.1} parent=11 // pred_check
          %p362 = pneg %p216
        $region42: #{tpu_custom_call.1} parent=11 // pred_check_branch
          %364 = sbr.rel (%p362) target = $region44
        $region43: #{tpu_custom_call.1} parent=11 // pred_region
          _
        $region44: #{tpu_custom_call.1} parent=11 // pred_fallthru
          _
        // Predicated region
        $region45: #{tpu_custom_call.1} parent=11 // pred_check
          %p365 = pneg %p237
        $region46: #{tpu_custom_call.1} parent=11 // pred_check_branch
          %367 = sbr.rel (%p365) target = $region48
        $region47: #{tpu_custom_call.1} parent=11 // pred_region
          _
        $region48: #{tpu_custom_call.1} parent=11 // pred_fallthru
          _
        // Predicated region
        $region49: #{tpu_custom_call.1} parent=11 // pred_check
          %p368 = pneg %p258
        $region50: #{tpu_custom_call.1} parent=11 // pred_check_branch
          %370 = sbr.rel (%p368) target = $region52
        $region51: #{tpu_custom_call.1} parent=11 // pred_region
          _
        $region52: #{tpu_custom_call.1} parent=11 // pred_fallthru
          _
        // Predicated region
        $region53: #{tpu_custom_call.1} parent=11 // pred_check
          %p371 = pneg %p279
        $region54: #{tpu_custom_call.1} parent=11 // pred_check_branch
          %373 = sbr.rel (%p371) target = $region56
        $region55: #{tpu_custom_call.1} parent=11 // pred_region
          _
        $region56: #{tpu_custom_call.1} parent=11 // pred_fallthru
          _
        // Predicated region
        $region57: #{tpu_custom_call.1} parent=11 // pred_check
          %p374 = pneg %p300
        $region58: #{tpu_custom_call.1} parent=11 // pred_check_branch
          %376 = sbr.rel (%p374) target = $region60
        $region59: #{tpu_custom_call.1} parent=11 // pred_region
          _
        $region60: #{tpu_custom_call.1} parent=11 // pred_fallthru
          _
      $region12: #{tpu_custom_call.1} parent=5 // pred_fallthru
        _
      %p377 = scmp.lt.s32.totalorder %s22, 2
      // Predicated region
      $region61: #{tpu_custom_call.1} parent=5 // pred_check
        %p378 = pneg %p377
      $region62: #{tpu_custom_call.1} parent=5 // pred_check_branch
        %380 = sbr.rel (%p378) target = $region64
      $region63: #{tpu_custom_call.1} parent=5 // pred_region
        // Predicated region
        $region65: #{tpu_custom_call.1} parent=63 // pred_check
          %p381 = pneg %p42
        $region66: #{tpu_custom_call.1} parent=63 // pred_check_branch
          %383 = sbr.rel (%p381) target = $region68
        $region67: #{tpu_custom_call.1} parent=63 // pred_region
          %p384 = scmp.lt.s32.totalorder %s22, 1
          %s385 = scalar_select %p384, %s22, 1
          %s386 = smul.addr %s385, 8
          %s387 = scalar_lea.vmem %s0, %s386
        $region68: #{tpu_custom_call.1} parent=63 // pred_fallthru
          _
      $region64: #{tpu_custom_call.1} parent=5 // pred_fallthru
        _
      %p388 = scmp.le.s32.totalorder 1, %s22
      %p389 = scmp.lt.s32.totalorder %s22, 3
      %p390 = pnand %p388, %p389
      %p391 = pneg %p390
      // Predicated region
      $region69: #{tpu_custom_call.1} parent=5 // pred_check
        _
      $region70: #{tpu_custom_call.1} parent=5 // pred_check_branch
        %393 = sbr.rel (%p390) target = $region72
      $region71: #{tpu_custom_call.1} parent=5 // pred_region
        %s394 = ssub.s32 %s22, 1
        %p395 = scmp.lt.s32.totalorder %s27, 1
        %s396 = scalar_select %p395, %s27, 1
        %s397 = smul.addr %s396, 8
        %s398 = scalar_lea.vmem %s0, %s397
        %p399 = pneg %p48
        %p400 = pneg %p45
        %p401 = pneg %p69
        %p402 = pneg %p66
        %p403 = pneg %p90
        %p404 = pneg %p87
        %p405 = pneg %p111
        %p406 = pneg %p108
        %p407 = pneg %p132
        %p408 = pneg %p129
        %p409 = pneg %p153
        %p410 = pneg %p150
        %p411 = pneg %p174
        %p412 = pneg %p171
        %p413 = pneg %p195
        %p414 = pneg %p192
        %p415 = pneg %p216
        %p416 = pneg %p213
        %p417 = pneg %p237
        %p418 = pneg %p234
        %p419 = pneg %p258
        %p420 = pneg %p255
        %p421 = pneg %p279
        %p422 = pneg %p276
        %p423 = pneg %p300
        %p424 = pneg %p297
        %p425 = pneg %p326
        %p426 = pneg %p323
        %s427 = sand.u32 %s313, 1
        %s428 = scalar_lea.sflag [#allocation3], %s427
        %s429 = sand.u32 %s313, 1
        %s430 = smul.addr %s429, 8
        %s431 = scalar_lea.vmem [#allocation2], %s430
        %p432 = scmp.lt.s32.totalorder %s27, 1
        %s433 = scalar_select %p432, %s27, 1
        %s434 = smul.addr %s433, 8
        %s435 = scalar_lea.vmem %s0, %s434
        %v436 = vld [vmem:[%s435] sm:$0xff]
        %v437 = vld [vmem:[%s1] sm:$0xff]
        %v438 = vadd.f32 %v436, %v437
        %v439 = vld [vmem:[%s2] sm:$0xff]
        %v440 = vld [vmem:[%s2 + $0x8] sm:$0xff]
        %v441 = vld [vmem:[%s2 + $0x10] sm:$0xff]
        %v442 = vld [vmem:[%s2 + $0x18] sm:$0xff]
        %443 = vxpose.xlu0.b32.start [1/16] %v439, 128
        %444 = vxpose.xlu0.b32.cont [2/16] %v440, 128
        %445 = vxpose.xlu0.b32.cont [3/16] %v441, 128
        %446 = vxpose.xlu0.b32.cont [4/16] %v442, 128
        %447 = vxpose.xlu0.b32.cont [5/16] 0.0, 128
        %448 = vxpose.xlu0.b32.cont [6/16] 0.0, 128
        %449 = vxpose.xlu0.b32.cont [7/16] 0.0, 128
        %450 = vxpose.xlu0.b32.cont [8/16] 0.0, 128
        %451 = vxpose.xlu0.b32.cont [9/16] 0.0, 128
        %452 = vxpose.xlu0.b32.cont [10/16] 0.0, 128
        %453 = vxpose.xlu0.b32.cont [11/16] 0.0, 128
        %454 = vxpose.xlu0.b32.cont [12/16] 0.0, 128
        %455 = vxpose.xlu0.b32.cont [13/16] 0.0, 128
        %456 = vxpose.xlu0.b32.cont [14/16] 0.0, 128
        %457 = vxpose.xlu0.b32.cont [15/16] 0.0, 128
        %458 = vxpose.xlu0.b32.end [16/16] 0.0, 128
        %v459 = vpop.trf.xlu0
        %v460 = vpop.trf.xlu0
        %v461 = vpop.trf.xlu0
        %v462 = vpop.trf.xlu0
        %v463 = vpop.trf.xlu0
        %v464 = vpop.trf.xlu0
        %v465 = vpop.trf.xlu0
        %v466 = vpop.trf.xlu0
        %v467 = vpop.trf.xlu0
        %v468 = vpop.trf.xlu0
        %v469 = vpop.trf.xlu0
        %v470 = vpop.trf.xlu0
        %v471 = vpop.trf.xlu0
        %v472 = vpop.trf.xlu0
        %v473 = vpop.trf.xlu0
        %v474 = vpop.trf.xlu0
        %vm475 = vcmask 261120
        %v477 = vsel %vm475, %v459, 0
        %v480 = vsel %vm475, %v460, 0
        %v483 = vsel %vm475, %v461, 0
        %v486 = vsel %vm475, %v462, 0
        %v489 = vsel %vm475, %v463, 0
        %v492 = vsel %vm475, %v464, 0
        %v495 = vsel %vm475, %v465, 0
        %v498 = vsel %vm475, %v466, 0
        %v501 = vsel %vm475, %v467, 0
        %v504 = vsel %vm475, %v468, 0
        %v507 = vsel %vm475, %v469, 0
        %v510 = vsel %vm475, %v470, 0
        %v513 = vsel %vm475, %v438, 0
        %515 = vmatpush.xpose.msra.mxu0 0.0
        %516 = vmatpush.xpose.msra.mxu0 0.0
        %517 = vmatpush.xpose.msra.mxu0 0.0
        %518 = vmatpush.xpose.msra.mxu0 0.0
        %519 = vmatpush.xpose.msra.mxu0 0.0
        %520 = vmatpush.xpose.msra.mxu0 0.0
        %521 = vmatpush.xpose.msra.mxu0 0.0
        %522 = vmatpush.xpose.msra.mxu0 0.0
        %523 = vmatpush.xpose.msra.mxu0 0.0
        %524 = vmatpush.xpose.msra.mxu0 0.0
        %525 = vmatpush.xpose.msra.mxu0 0.0
        %526 = vmatpush.xpose.msra.mxu0 0.0
        %527 = vmatpush.xpose.msra.mxu0 0.0
        %528 = vmatpush.xpose.msra.mxu0 0.0
        %529 = vmatpush.xpose.msra.mxu0 0.0
        %530 = vmatpush.xpose.msra.mxu0 %v513
        %531 = vmatmul.f32.gmra.mxu0 %v477
        %v532 = vpop.f32.mrf.mxu0
        %v533 = vadd.f32 0.0, %v532
        %534 = vmatmul.f32.gmra.mxu0 %v480
        %v535 = vpop.f32.mrf.mxu0
        %v536 = vadd.f32 0.0, %v535
        %537 = vmatmul.f32.gmra.mxu0 %v483
        %v538 = vpop.f32.mrf.mxu0
        %v539 = vadd.f32 0.0, %v538
        %540 = vmatmul.f32.gmra.mxu0 %v486
        %v541 = vpop.f32.mrf.mxu0
        %v542 = vadd.f32 0.0, %v541
        %543 = vmatmul.f32.gmra.mxu0 %v489
        %v544 = vpop.f32.mrf.mxu0
        %v545 = vadd.f32 0.0, %v544
        %546 = vmatmul.f32.gmra.mxu0 %v492
        %v547 = vpop.f32.mrf.mxu0
        %v548 = vadd.f32 0.0, %v547
        %549 = vmatmul.f32.gmra.mxu0 %v495
        %v550 = vpop.f32.mrf.mxu0
        %v551 = vadd.f32 0.0, %v550
        %552 = vmatmul.f32.gmra.mxu0 %v498
        %v553 = vpop.f32.mrf.mxu0
        %v554 = vadd.f32 0.0, %v553
        %555 = vmatmul.f32.gmra.mxu0 %v501
        %v556 = vpop.f32.mrf.mxu0
        %v557 = vadd.f32 0.0, %v556
        %558 = vmatmul.f32.gmra.mxu0 %v504
        %v559 = vpop.f32.mrf.mxu0
        %v560 = vadd.f32 0.0, %v559
        %561 = vmatmul.f32.gmra.mxu0 %v507
        %v562 = vpop.f32.mrf.mxu0
        %v563 = vadd.f32 0.0, %v562
        %564 = vmatmul.f32.gmra.mxu0 %v510
        %v565 = vpop.f32.mrf.mxu0
        %v566 = vadd.f32 0.0, %v565
        %567 = vdwg.mxu0
        %vm568 = vcmask 64512
        %v570 = vsel %vm568, %v533, 0
        %v573 = vsel %vm568, %v545, 0
        %575 = vmatpush.xpose.msra.mxu0 0.0
        %576 = vmatpush.xpose.msra.mxu0 0.0
        %577 = vmatpush.xpose.msra.mxu0 0.0
        %578 = vmatpush.xpose.msra.mxu0 0.0
        %579 = vmatpush.xpose.msra.mxu0 0.0
        %580 = vmatpush.xpose.msra.mxu0 0.0
        %581 = vmatpush.xpose.msra.mxu0 0.0
        %582 = vmatpush.xpose.msra.mxu0 0.0
        %583 = vmatpush.xpose.msra.mxu0 0.0
        %584 = vmatpush.xpose.msra.mxu0 0.0
        %585 = vmatpush.xpose.msra.mxu0 0.0
        %586 = vmatpush.xpose.msra.mxu0 0.0
        %587 = vmatpush.xpose.msra.mxu0 0.0
        %588 = vmatpush.xpose.msra.mxu0 0.0
        %589 = vmatpush.xpose.msra.mxu0 0.0
        %590 = vmatpush.xpose.msra.mxu0 %v573
        %591 = vmatmul.f32.gmra.mxu0 %v570
        %v592 = vpop.f32.mrf.mxu0
        %v593 = vadd.f32 0.0, %v592
        %594 = vdwg.mxu0
        %v596 = vsel %vm568, %v536, 0
        %v599 = vsel %vm568, %v548, 0
        %601 = vmatpush.xpose.msra.mxu0 0.0
        %602 = vmatpush.xpose.msra.mxu0 0.0
        %603 = vmatpush.xpose.msra.mxu0 0.0
        %604 = vmatpush.xpose.msra.mxu0 0.0
        %605 = vmatpush.xpose.msra.mxu0 0.0
        %606 = vmatpush.xpose.msra.mxu0 0.0
        %607 = vmatpush.xpose.msra.mxu0 0.0
        %608 = vmatpush.xpose.msra.mxu0 0.0
        %609 = vmatpush.xpose.msra.mxu0 0.0
        %610 = vmatpush.xpose.msra.mxu0 0.0
        %611 = vmatpush.xpose.msra.mxu0 0.0
        %612 = vmatpush.xpose.msra.mxu0 0.0
        %613 = vmatpush.xpose.msra.mxu0 0.0
        %614 = vmatpush.xpose.msra.mxu0 0.0
        %615 = vmatpush.xpose.msra.mxu0 0.0
        %616 = vmatpush.xpose.msra.mxu0 %v599
        %617 = vmatmul.f32.gmra.mxu0 %v596
        %v618 = vpop.f32.mrf.mxu0
        %v619 = vadd.f32 0.0, %v618
        %620 = vdwg.mxu0
        %v622 = vsel %vm568, %v539, 0
        %v625 = vsel %vm568, %v551, 0
        %627 = vmatpush.xpose.msra.mxu0 0.0
        %628 = vmatpush.xpose.msra.mxu0 0.0
        %629 = vmatpush.xpose.msra.mxu0 0.0
        %630 = vmatpush.xpose.msra.mxu0 0.0
        %631 = vmatpush.xpose.msra.mxu0 0.0
        %632 = vmatpush.xpose.msra.mxu0 0.0
        %633 = vmatpush.xpose.msra.mxu0 0.0
        %634 = vmatpush.xpose.msra.mxu0 0.0
        %635 = vmatpush.xpose.msra.mxu0 0.0
        %636 = vmatpush.xpose.msra.mxu0 0.0
        %637 = vmatpush.xpose.msra.mxu0 0.0
        %638 = vmatpush.xpose.msra.mxu0 0.0
        %639 = vmatpush.xpose.msra.mxu0 0.0
        %640 = vmatpush.xpose.msra.mxu0 0.0
        %641 = vmatpush.xpose.msra.mxu0 0.0
        %642 = vmatpush.xpose.msra.mxu0 %v625
        %643 = vmatmul.f32.gmra.mxu0 %v622
        %v644 = vpop.f32.mrf.mxu0
        %v645 = vadd.f32 0.0, %v644
        %646 = vdwg.mxu0
        %v648 = vsel %vm568, %v542, 0
        %v651 = vsel %vm568, %v554, 0
        %653 = vmatpush.xpose.msra.mxu0 0.0
        %654 = vmatpush.xpose.msra.mxu0 0.0
        %655 = vmatpush.xpose.msra.mxu0 0.0
        %656 = vmatpush.xpose.msra.mxu0 0.0
        %657 = vmatpush.xpose.msra.mxu0 0.0
        %658 = vmatpush.xpose.msra.mxu0 0.0
        %659 = vmatpush.xpose.msra.mxu0 0.0
        %660 = vmatpush.xpose.msra.mxu0 0.0
        %661 = vmatpush.xpose.msra.mxu0 0.0
        %662 = vmatpush.xpose.msra.mxu0 0.0
        %663 = vmatpush.xpose.msra.mxu0 0.0
        %664 = vmatpush.xpose.msra.mxu0 0.0
        %665 = vmatpush.xpose.msra.mxu0 0.0
        %666 = vmatpush.xpose.msra.mxu0 0.0
        %667 = vmatpush.xpose.msra.mxu0 0.0
        %668 = vmatpush.xpose.msra.mxu0 %v651
        %669 = vmatmul.f32.gmra.mxu0 %v648
        %v670 = vpop.f32.mrf.mxu0
        %v671 = vadd.f32 0.0, %v670
        %672 = vdwg.mxu0
        %v673 = vmul.f32 %v593, 0.17677669
        %v674 = vmul.f32 %v619, 0.17677669
        %v675 = vmul.f32 %v645, 0.17677669
        %v676 = vmul.f32 %v671, 0.17677669
        %v677 = vsel %vm568, %v673, -inf
        %678 = vmax.xlane.f32.xlu0 %v677
        %v679 = vpop.xlane.xlu0 %678
        %v680 = vsel %vm568, %v674, -inf
        %681 = vmax.xlane.f32.xlu0 %v680
        %v682 = vpop.xlane.xlu0 %681
        %v683 = vsel %vm568, %v675, -inf
        %684 = vmax.xlane.f32.xlu0 %v683
        %v685 = vpop.xlane.xlu0 %684
        %v686 = vsel %vm568, %v676, -inf
        %687 = vmax.xlane.f32.xlu0 %v686
        %v688 = vpop.xlane.xlu0 %687
        %v689 = vsub.f32 %v673, %v679
        %v690 = vsub.f32 %v674, %v682
        %v691 = vsub.f32 %v675, %v685
        %v692 = vsub.f32 %v676, %v688
        %v693 = vmul.f32 %v689, 1.442695
        %v694 = vpow.pop %v693
        %v695 = vmul.f32 %v690, 1.442695
        %v696 = vpow.pop %v695
        %v697 = vmul.f32 %v691, 1.442695
        %v698 = vpow.pop %v697
        %v699 = vmul.f32 %v692, 1.442695
        %v700 = vpow.pop %v699
        %v701 = vsel %vm568, %v694, 0.0
        %702 = vadd.xlane.f32.xlu0 %v701
        %v703 = vpop.xlane.xlu0 %702
        %v704 = vsel %vm568, %v696, 0.0
        %705 = vadd.xlane.f32.xlu0 %v704
        %v706 = vpop.xlane.xlu0 %705
        %v707 = vsel %vm568, %v698, 0.0
        %708 = vadd.xlane.f32.xlu0 %v707
        %v709 = vpop.xlane.xlu0 %708
        %v710 = vsel %vm568, %v700, 0.0
        %711 = vadd.xlane.f32.xlu0 %v710
        %v712 = vpop.xlane.xlu0 %711
        %v713 = vrcp.pop %v703
        %v714 = vmul.f32 %v703, %v713
        %v715 = vsub.f32 1.0, %v714
        %v716 = vmul.f32 %v713, %v715
        %v717 = vadd.f32 %v713, %v716
        %vm718 = vweird.f32 %v703
        %vm719 = vweird.f32 %v713
        %vm720 = vmor %vm718, %vm719
        %v721 = vsel %vm720, %v713, %v717
        %v722 = vand.u32 2147483647, %v703
        %vm723 = vcmp.eq.f32.partialorder %v722, 8.507059e+37
        %v724 = vand.u32 %v703, 2147483648
        %v725 = vor.u32 1.1754944e-38, %v724
        %v726 = vsel %vm723, %v725, %v721
        %v727 = vmul.f32 %v694, %v726
        %v728 = vrcp.pop %v706
        %v729 = vmul.f32 %v706, %v728
        %v730 = vsub.f32 1.0, %v729
        %v731 = vmul.f32 %v728, %v730
        %v732 = vadd.f32 %v728, %v731
        %vm733 = vweird.f32 %v706
        %vm734 = vweird.f32 %v728
        %vm735 = vmor %vm733, %vm734
        %v736 = vsel %vm735, %v728, %v732
        %v737 = vand.u32 2147483647, %v706
        %vm738 = vcmp.eq.f32.partialorder %v737, 8.507059e+37
        %v739 = vand.u32 %v706, 2147483648
        %v740 = vor.u32 1.1754944e-38, %v739
        %v741 = vsel %vm738, %v740, %v736
        %v742 = vmul.f32 %v696, %v741
        %v743 = vrcp.pop %v709
        %v744 = vmul.f32 %v709, %v743
        %v745 = vsub.f32 1.0, %v744
        %v746 = vmul.f32 %v743, %v745
        %v747 = vadd.f32 %v743, %v746
        %vm748 = vweird.f32 %v709
        %vm749 = vweird.f32 %v743
        %vm750 = vmor %vm748, %vm749
        %v751 = vsel %vm750, %v743, %v747
        %v752 = vand.u32 2147483647, %v709
        %vm753 = vcmp.eq.f32.partialorder %v752, 8.507059e+37
        %v754 = vand.u32 %v709, 2147483648
        %v755 = vor.u32 1.1754944e-38, %v754
        %v756 = vsel %vm753, %v755, %v751
        %v757 = vmul.f32 %v698, %v756
        %v758 = vrcp.pop %v712
        %v759 = vmul.f32 %v712, %v758
        %v760 = vsub.f32 1.0, %v759
        %v761 = vmul.f32 %v758, %v760
        %v762 = vadd.f32 %v758, %v761
        %vm763 = vweird.f32 %v712
        %vm764 = vweird.f32 %v758
        %vm765 = vmor %vm763, %vm764
        %v766 = vsel %vm765, %v758, %v762
        %v767 = vand.u32 2147483647, %v712
        %vm768 = vcmp.eq.f32.partialorder %v767, 8.507059e+37
        %v769 = vand.u32 %v712, 2147483648
        %v770 = vor.u32 1.1754944e-38, %v769
        %v771 = vsel %vm768, %v770, %v766
        %v772 = vmul.f32 %v700, %v771
        %v774 = vsel %vm568, %v727, 0
        %776 = vmatpush.msra.mxu0 0.0
        %777 = vmatpush.msra.mxu0 0.0
        %778 = vmatpush.msra.mxu0 0.0
        %779 = vmatpush.msra.mxu0 0.0
        %780 = vmatpush.msra.mxu0 0.0
        %781 = vmatpush.msra.mxu0 0.0
        %782 = vmatpush.msra.mxu0 0.0
        %783 = vmatpush.msra.mxu0 0.0
        %784 = vmatpush.msra.mxu0 0.0
        %785 = vmatpush.msra.mxu0 0.0
        %786 = vmatpush.msra.mxu0 0.0
        %787 = vmatpush.msra.mxu0 0.0
        %788 = vmatpush.msra.mxu0 0.0
        %789 = vmatpush.msra.mxu0 0.0
        %790 = vmatpush.msra.mxu0 0.0
        %791 = vmatpush.msra.mxu0 %v557
        %792 = vmatmul.f32.gmra.mxu0 %v774
        %v793 = vpop.f32.mrf.mxu0
        %v794 = vadd.f32 0.0, %v793
        %795 = vdwg.mxu0
        %v797 = vsel %vm568, %v742, 0
        %799 = vmatpush.msra.mxu0 0.0
        %800 = vmatpush.msra.mxu0 0.0
        %801 = vmatpush.msra.mxu0 0.0
        %802 = vmatpush.msra.mxu0 0.0
        %803 = vmatpush.msra.mxu0 0.0
        %804 = vmatpush.msra.mxu0 0.0
        %805 = vmatpush.msra.mxu0 0.0
        %806 = vmatpush.msra.mxu0 0.0
        %807 = vmatpush.msra.mxu0 0.0
        %808 = vmatpush.msra.mxu0 0.0
        %809 = vmatpush.msra.mxu0 0.0
        %810 = vmatpush.msra.mxu0 0.0
        %811 = vmatpush.msra.mxu0 0.0
        %812 = vmatpush.msra.mxu0 0.0
        %813 = vmatpush.msra.mxu0 0.0
        %814 = vmatpush.msra.mxu0 %v560
        %815 = vmatmul.f32.gmra.mxu0 %v797
        %v816 = vpop.f32.mrf.mxu0
        %v817 = vadd.f32 0.0, %v816
        %818 = vdwg.mxu0
        %v820 = vsel %vm568, %v757, 0
        %822 = vmatpush.msra.mxu0 0.0
        %823 = vmatpush.msra.mxu0 0.0
        %824 = vmatpush.msra.mxu0 0.0
        %825 = vmatpush.msra.mxu0 0.0
        %826 = vmatpush.msra.mxu0 0.0
        %827 = vmatpush.msra.mxu0 0.0
        %828 = vmatpush.msra.mxu0 0.0
        %829 = vmatpush.msra.mxu0 0.0
        %830 = vmatpush.msra.mxu0 0.0
        %831 = vmatpush.msra.mxu0 0.0
        %832 = vmatpush.msra.mxu0 0.0
        %833 = vmatpush.msra.mxu0 0.0
        %834 = vmatpush.msra.mxu0 0.0
        %835 = vmatpush.msra.mxu0 0.0
        %836 = vmatpush.msra.mxu0 0.0
        %837 = vmatpush.msra.mxu0 %v563
        %838 = vmatmul.f32.gmra.mxu0 %v820
        %v839 = vpop.f32.mrf.mxu0
        %v840 = vadd.f32 0.0, %v839
        %841 = vdwg.mxu0
        %v843 = vsel %vm568, %v772, 0
        %845 = vmatpush.msra.mxu0 0.0
        %846 = vmatpush.msra.mxu0 0.0
        %847 = vmatpush.msra.mxu0 0.0
        %848 = vmatpush.msra.mxu0 0.0
        %849 = vmatpush.msra.mxu0 0.0
        %850 = vmatpush.msra.mxu0 0.0
        %851 = vmatpush.msra.mxu0 0.0
        %852 = vmatpush.msra.mxu0 0.0
        %853 = vmatpush.msra.mxu0 0.0
        %854 = vmatpush.msra.mxu0 0.0
        %855 = vmatpush.msra.mxu0 0.0
        %856 = vmatpush.msra.mxu0 0.0
        %857 = vmatpush.msra.mxu0 0.0
        %858 = vmatpush.msra.mxu0 0.0
        %859 = vmatpush.msra.mxu0 0.0
        %860 = vmatpush.msra.mxu0 %v566
        %861 = vmatmul.f32.gmra.mxu0 %v843
        %v862 = vpop.f32.mrf.mxu0
        %v863 = vadd.f32 0.0, %v862
        %864 = vdwg.mxu0
        %v865 = vrot.slane %v840, 4
        %vm866 = vcmask 1047556
        %v867 = vsel %vm866, %v865, %v794
        %v868 = vrot.slane %v794, 4
        %v869 = vsel %vm866, %v840, %v868
        %v871 = vunpack.c.l.s4 1983009808
        %v872 = vunpack.c.0.s8 %v871
        %v873 = vperm.slane %v867, %v872
        %v875 = vunpack.c.l.s4 1983009808
        %v876 = vunpack.c.0.s8 %v875
        %v877 = vperm.slane %v869, %v876
        %v878 = vrot.slane %v863, 4
        %v879 = vsel %vm866, %v878, %v817
        %v880 = vrot.slane %v817, 4
        %v881 = vsel %vm866, %v863, %v880
        %v883 = vunpack.c.l.s4 1983009808
        %v884 = vunpack.c.0.s8 %v883
        %v885 = vperm.slane %v879, %v884
        %v887 = vunpack.c.l.s4 1983009808
        %v888 = vunpack.c.0.s8 %v887
        %v889 = vperm.slane %v881, %v888
        %v890 = vrot.slane %v885, 4
        %v891 = vsel %vm866, %v890, %v873
        %v892 = vrot.slane %v873, 4
        %v893 = vsel %vm866, %v885, %v892
        %v895 = vunpack.c.l.s4 1934713408
        %v896 = vunpack.c.0.s8 %v895
        %v897 = vperm.slane %v891, %v896
        %v899 = vunpack.c.l.s4 1934713408
        %v900 = vunpack.c.0.s8 %v899
        %v901 = vperm.slane %v893, %v900
        %v902 = vrot.slane %v889, 4
        %v903 = vsel %vm866, %v902, %v877
        %v904 = vrot.slane %v877, 4
        %v905 = vsel %vm866, %v889, %v904
        %v907 = vunpack.c.l.s4 1934713408
        %v908 = vunpack.c.0.s8 %v907
        %v909 = vperm.slane %v903, %v908
        %v911 = vunpack.c.l.s4 1934713408
        %v912 = vunpack.c.0.s8 %v911
        %v913 = vperm.slane %v905, %v912
        %v914 = vrot.slane %v897, 4
        %v915 = vsel %vm866, 0.0, %v914
        %v916 = vrot.slane %v901, 4
        %v917 = vsel %vm866, 0.0, %v916
        %v918 = vrot.slane %v909, 4
        %v919 = vsel %vm866, 0.0, %v918
        %v920 = vrot.slane %v913, 4
        %v921 = vsel %vm866, 0.0, %v920
        %v922 = vsel %vm866, %v916, %v897
        %v924 = vunpack.c.l.s4 1983009808
        %v925 = vunpack.c.0.s8 %v924
        %v926 = vperm.slane %v922, %v925
        %v927 = vrot.slane %v917, 4
        %v928 = vsel %vm866, %v927, %v915
        %v930 = vunpack.c.l.s4 1983009808
        %v931 = vunpack.c.0.s8 %v930
        %v932 = vperm.slane %v928, %v931
        %v933 = vsel %vm866, %v920, %v909
        %v935 = vunpack.c.l.s4 1983009808
        %v936 = vunpack.c.0.s8 %v935
        %v937 = vperm.slane %v933, %v936
        %v938 = vrot.slane %v921, 4
        %v939 = vsel %vm866, %v938, %v919
        %v941 = vunpack.c.l.s4 1983009808
        %v942 = vunpack.c.0.s8 %v941
        %v943 = vperm.slane %v939, %v942
        %v944 = vrot.slane %v932, 4
        %v945 = vsel %vm866, %v944, %v926
        %v946 = vrot.slane %v926, 4
        %v947 = vsel %vm866, %v932, %v946
        %v949 = vunpack.c.l.s4 1934713408
        %v950 = vunpack.c.0.s8 %v949
        %v951 = vperm.slane %v945, %v950
        %v953 = vunpack.c.l.s4 1934713408
        %v954 = vunpack.c.0.s8 %v953
        %v955 = vperm.slane %v947, %v954
        %v956 = vrot.slane %v943, 4
        %v957 = vsel %vm866, %v956, %v937
        %v958 = vrot.slane %v937, 4
        %v959 = vsel %vm866, %v943, %v958
        %v961 = vunpack.c.l.s4 1934713408
        %v962 = vunpack.c.0.s8 %v961
        %v963 = vperm.slane %v957, %v962
        %v965 = vunpack.c.l.s4 1934713408
        %v966 = vunpack.c.0.s8 %v965
        %v967 = vperm.slane %v959, %v966
        %v968 = vrot.slane %v963, 4
        %v969 = vsel %vm866, %v968, %v951
        %v970 = vrot.slane %v951, 4
        %v971 = vsel %vm866, %v963, %v970
        %v972 = vrot.slane %v967, 4
        %v973 = vsel %vm866, %v972, %v955
        %v974 = vrot.slane %v955, 4
        %v975 = vsel %vm866, %v967, %v974
        %977 = vrot.lane.b32.xlu0 %v971, 8
        %v978 = vpop.permute.xlu0 %977
        %981 = vrot.lane.b32.xlu0 %v973, 16
        %v982 = vpop.permute.xlu0 %981
        %985 = vrot.lane.b32.xlu0 %v975, 24
        %v986 = vpop.permute.xlu0 %985
        %v988 = vsel %vm568, %v969, %v978
        %vm989 = vcmask 130048
        %v990 = vsel %vm989, %v988, %v982
        %vm991 = vcmask 195584
        %v992 = vsel %vm991, %v990, %v986
        %v993 = vld [vmem:[%s3] sm:$0xff]
        %v994 = vld [vmem:[%s3 + $0x8] sm:$0xff]
        %v995 = vld [vmem:[%s3 + $0x10] sm:$0xff]
        %v996 = vld [vmem:[%s3 + $0x18] sm:$0xff]
        %v997 = vld [vmem:[%s4] sm:$0x1]
        %v999 = vperm.slane %v997, 0
        %v1002 = vsel %vm475, %v992, 0
        %1004 = vmatpush.msra.mxu0 0.0
        %1005 = vmatpush.msra.mxu0 0.0
        %1006 = vmatpush.msra.mxu0 0.0
        %1007 = vmatpush.msra.mxu0 0.0
        %1008 = vmatpush.msra.mxu0 0.0
        %1009 = vmatpush.msra.mxu0 0.0
        %1010 = vmatpush.msra.mxu0 0.0
        %1011 = vmatpush.msra.mxu0 0.0
        %1012 = vmatpush.msra.mxu0 0.0
        %1013 = vmatpush.msra.mxu0 0.0
        %1014 = vmatpush.msra.mxu0 0.0
        %1015 = vmatpush.msra.mxu0 0.0
        %1016 = vmatpush.msra.mxu0 %v996
        %1017 = vmatpush.msra.mxu0 %v995
        %1018 = vmatpush.msra.mxu0 %v994
        %1019 = vmatpush.msra.mxu0 %v993
        %1020 = vmatmul.f32.gmra.mxu0 %v1002
        %v1021 = vpop.f32.mrf.mxu0
        %v1022 = vadd.f32 %v999, %v1021
        %1023 = vdwg.mxu0
        %v1024 = vadd.f32 %v1022, %v438
        %v1025 = vld [vmem:[%s5] sm:$0x1]
        %v1026 = vld [vmem:[%s6] sm:$0x1]
        %v1027 = vsel %vm475, %v1024, 0.0
        %1028 = vadd.xlane.f32.xlu0 %v1027
        %v1029 = vpop.xlane.xlu0 %1028
        %v1030 = vrcp.pop 32.0
        %v1031 = vmul.f32 32.0, %v1030
        %v1032 = vsub.f32 1.0, %v1031
        %v1033 = vmul.f32 %v1030, %v1032
        %v1034 = vadd.f32 %v1030, %v1033
        %vm1035 = vweird.f32 %v1030
        %v1036 = vsel %vm1035, %v1030, %v1034
        %v1037 = vmul.f32 %v1029, %v1036
        %v1038 = vsub.f32 %v1024, %v1037
        %v1039 = vmul.f32 %v1038, %v1038
        %v1040 = vsel %vm475, %v1039, 0.0
        %1041 = vadd.xlane.f32.xlu0 %v1040
        %v1042 = vpop.xlane.xlu0 %1041
        %v1043 = vmul.f32 %v1042, %v1036
        %v1044 = vadd.f32 %v1043, 1e-05
        %v1045 = vrsqrt.pop %v1044
        %v1046 = vmul.f32 %v1045, %v1044
        %v1047 = vmul.f32 %v1046, %v1045
        %v1048 = vmul.f32 0.5, %v1047
        %v1049 = vsub.f32 1.5, %v1048
        %v1050 = vmul.f32 %v1045, %v1049
        %vm1051 = vweird.f32 %v1044
        %vm1052 = vweird.f32 %v1045
        %vm1053 = vmor %vm1051, %vm1052
        %v1054 = vsel %vm1053, %v1045, %v1050
        %v1055 = vmul.f32 %v1038, %v1054
        %v1057 = vperm.slane %v1025, 0
        %v1059 = vmul.f32 %v1055, %v1057
        %v1061 = vperm.slane %v1026, 0
        %v1063 = vadd.f32 %v1059, %v1061
        %v1064 = vld [vmem:[%s7] sm:$0xff]
        %v1065 = vld [vmem:[%s7 + $0x8] sm:$0xff]
        %v1066 = vld [vmem:[%s7 + $0x10] sm:$0xff]
        %v1067 = vld [vmem:[%s7 + $0x18] sm:$0xff]
        %v1068 = vld [vmem:[%s8] sm:$0x1]
        %v1070 = vperm.slane %v1068, 0
        %v1073 = vsel %vm475, %v1063, 0
        %1075 = vmatpush.msra.mxu0 0.0
        %1076 = vmatpush.msra.mxu0 0.0
        %1077 = vmatpush.msra.mxu0 0.0
        %1078 = vmatpush.msra.mxu0 0.0
        %1079 = vmatpush.msra.mxu0 0.0
        %1080 = vmatpush.msra.mxu0 0.0
        %1081 = vmatpush.msra.mxu0 0.0
        %1082 = vmatpush.msra.mxu0 0.0
        %1083 = vmatpush.msra.mxu0 0.0
        %1084 = vmatpush.msra.mxu0 0.0
        %1085 = vmatpush.msra.mxu0 0.0
        %1086 = vmatpush.msra.mxu0 0.0
        %1087 = vmatpush.msra.mxu0 %v1067
        %1088 = vmatpush.msra.mxu0 %v1066
        %1089 = vmatpush.msra.mxu0 %v1065
        %1090 = vmatpush.msra.mxu0 %v1064
        %1091 = vmatmul.f32.gmra.mxu0 %v1073
        %v1092 = vpop.f32.mrf.mxu0
        %v1093 = vadd.f32 %v1070, %v1092
        %1094 = vdwg.mxu0
        %v1095 = vmax.f32 %v1093, 0.0
        %v1096 = vld [vmem:[%s9] sm:$0xff]
        %v1097 = vld [vmem:[%s9 + $0x8] sm:$0xff]
        %v1098 = vld [vmem:[%s9 + $0x10] sm:$0xff]
        %v1099 = vld [vmem:[%s9 + $0x18] sm:$0xff]
        %v1100 = vld [vmem:[%s9 + $0x20] sm:$0xff]
        %v1101 = vld [vmem:[%s9 + $0x28] sm:$0xff]
        %v1102 = vld [vmem:[%s9 + $0x30] sm:$0xff]
        %v1103 = vld [vmem:[%s9 + $0x38] sm:$0xff]
        %v1104 = vld [vmem:[%s9 + $0x40] sm:$0xff]
        %v1105 = vld [vmem:[%s9 + $0x48] sm:$0xff]
        %v1106 = vld [vmem:[%s9 + $0x50] sm:$0xff]
        %v1107 = vld [vmem:[%s9 + $0x58] sm:$0xff]
        %v1108 = vld [vmem:[%s9 + $0x60] sm:$0xff]
        %v1109 = vld [vmem:[%s9 + $0x68] sm:$0xff]
        %v1110 = vld [vmem:[%s9 + $0x70] sm:$0xff]
        %v1111 = vld [vmem:[%s9 + $0x78] sm:$0xff]
        %v1112 = vld [vmem:[%s10] sm:$0x1]
        %v1114 = vperm.slane %v1112, 0
        %1116 = vmatpush.msra.mxu0 %v1111
        %1117 = vmatpush.msra.mxu0 %v1110
        %1118 = vmatpush.msra.mxu0 %v1109
        %1119 = vmatpush.msra.mxu0 %v1108
        %1120 = vmatpush.msra.mxu0 %v1107
        %1121 = vmatpush.msra.mxu0 %v1106
        %1122 = vmatpush.msra.mxu0 %v1105
        %1123 = vmatpush.msra.mxu0 %v1104
        %1124 = vmatpush.msra.mxu0 %v1103
        %1125 = vmatpush.msra.mxu0 %v1102
        %1126 = vmatpush.msra.mxu0 %v1101
        %1127 = vmatpush.msra.mxu0 %v1100
        %1128 = vmatpush.msra.mxu0 %v1099
        %1129 = vmatpush.msra.mxu0 %v1098
        %1130 = vmatpush.msra.mxu0 %v1097
        %1131 = vmatpush.msra.mxu0 %v1096
        %1132 = vmatmul.f32.gmra.mxu0 %v1095
        %v1133 = vpop.f32.mrf.mxu0
        %v1134 = vadd.f32 %v1114, %v1133
        %1135 = vdwg.mxu0
        %v1136 = vadd.f32 %v1134, %v1063
        %v1137 = vld [vmem:[%s11] sm:$0x1]
        %v1138 = vld [vmem:[%s12] sm:$0x1]
        %v1139 = vsel %vm475, %v1136, 0.0
        %1140 = vadd.xlane.f32.xlu0 %v1139
        %v1141 = vpop.xlane.xlu0 %1140
        %v1142 = vmul.f32 %v1141, %v1036
        %v1143 = vsub.f32 %v1136, %v1142
        %v1144 = vmul.f32 %v1143, %v1143
        %v1145 = vsel %vm475, %v1144, 0.0
        %1146 = vadd.xlane.f32.xlu0 %v1145
        %v1147 = vpop.xlane.xlu0 %1146
        %v1148 = vmul.f32 %v1147, %v1036
        %v1149 = vadd.f32 %v1148, 1e-05
        %v1150 = vrsqrt.pop %v1149
        %v1151 = vmul.f32 %v1150, %v1149
        %v1152 = vmul.f32 %v1151, %v1150
        %v1153 = vmul.f32 0.5, %v1152
        %v1154 = vsub.f32 1.5, %v1153
        %v1155 = vmul.f32 %v1150, %v1154
        %vm1156 = vweird.f32 %v1149
        %vm1157 = vweird.f32 %v1150
        %vm1158 = vmor %vm1156, %vm1157
        %v1159 = vsel %vm1158, %v1150, %v1155
        %v1160 = vmul.f32 %v1143, %v1159
        %v1162 = vperm.slane %v1137, 0
        %v1164 = vmul.f32 %v1160, %v1162
        %v1166 = vperm.slane %v1138, 0
        %v1168 = vadd.f32 %v1164, %v1166
        %1169 = vst.msk [vmem:[%s431] sm:$0xff] %vm475, %v1168
        %s1170 = sand.u32 %s313, 1
        %s1171 = scalar_lea.sflag [#allocation3], %s1170
        %s1172 = sand.u32 %s313, 1
        %s1173 = smul.addr %s1172, 8
        %s1174 = scalar_lea.vmem [#allocation2], %s1173
        // Predicated region
        $region73: #{tpu_custom_call.1} parent=71 // pred_check
          %p1175 = pneg %p323
        $region74: #{tpu_custom_call.1} parent=71 // pred_check_branch
          %1177 = sbr.rel (%p1175) target = $region76
        $region75: #{tpu_custom_call.1} parent=71 // pred_region
          %1179 = vsyncadd %s1171, 0
          %s1180 = smul.addr %s27, 8
          %s1181 = scalar_lea.hbm %s13, %s1180
          %s1183 = sshll.u32 %s1174, 4
          %s1184 = int_to_ptr.vmem [resolvable:$true] %s1183
          %s1185 = sshll.u32 %s1181, 4
          %s1186 = int_to_ptr.hbm [resolvable:$true] %s1185
          %1188 = dma.vmem_to_hbm [thread:$0]  %s1184, 128, %s1186, %s1171
        $region76: #{tpu_custom_call.1} parent=71 // pred_fallthru
          _
      $region72: #{tpu_custom_call.1} parent=5 // pred_fallthru
        _
      %p1189 = scmp.le.s32.totalorder 2, %s22
      // Predicated region
      $region77: #{tpu_custom_call.1} parent=5 // pred_check
        %p1190 = pneg %p1189
      $region78: #{tpu_custom_call.1} parent=5 // pred_check_branch
        %1192 = sbr.rel (%p1190) target = $region80
      $region79: #{tpu_custom_call.1} parent=5 // pred_region
        %s1193 = ssub.s32 %s22, 2
        // Predicated region
        $region81: #{tpu_custom_call.1} parent=79 // pred_check
          %p1194 = pneg %p329
        $region82: #{tpu_custom_call.1} parent=79 // pred_check_branch
          %1196 = sbr.rel (%p1194) target = $region84
        $region83: #{tpu_custom_call.1} parent=79 // pred_region
          %s1197 = sand.u32 %s314, 1
          %s1198 = scalar_lea.sflag [#allocation3], %s1197
          %s1199 = sand.u32 %s314, 1
          %s1200 = smul.addr %s1199, 8
          %s1201 = scalar_lea.vmem [#allocation2], %s1200
          %1203 = dma.done %s1198, 128
        $region84: #{tpu_custom_call.1} parent=79 // pred_fallthru
          _
      $region80: #{tpu_custom_call.1} parent=5 // pred_fallthru
        _
    $region6: #{tpu_custom_call.1} parent=1 // loop_footer
      %s26 = sadd.s32 1, %s22
    $region7: #{tpu_custom_call.1} parent=1 // loop_footer_branch
      %21 = sbr.rel target = $region3
    $region8: #{tpu_custom_call.1} parent=1 // loop_exit
      _
    %1204 = vsyncpa [#allocation3], 1
    %s1205 = scalar_lea.sflag [#allocation3], 1
    %1206 = vsyncpa %s1205, 1

</llo_original>
